<compile_context>
chip_gen: v6e
topology: v6e:2x2x1
jax: 0.10.0
libtpu: 0.0.40
codegen_flags: <defaults>
</compile_context>

<pallas_src>
import jax
import jax.numpy as jnp
from jax import lax
from jax.experimental import pallas as pl
from jax.experimental.pallas import tpu as pltpu


def _round_up(x, m):
    return ((x + m - 1) // m) * m


def lstm_kernel(x_ref, w_ih_ref, w_hh_ref, b_ref, wfc_ref, bfc_ref, out_ref,
                gx_ref, h_ref, c_ref):
    """One (batch-tile, time-chunk) grid step of the LSTM.

    x_ref   : (Sc, BT, Ep)  padded embedded inputs for this time chunk (compute dtype)
    w_ih_ref: (Ep, 4*Hp)    input->gates weights (pre-transposed, gate order i,f,g,o)
    w_hh_ref: (Hp, 4*Hp)    hidden->gates weights (pre-transposed)
    b_ref   : (1, 4*Hp)     combined bias b_ih + b_hh (gate-padded), f32
    wfc_ref : (Hp, Op)      final linear weights (pre-transposed, padded)
    bfc_ref : (1, Op)       final linear bias (padded), f32
    out_ref : (BT, Op)      logits for this batch tile (lane-dense, written on last chunk)
    gx_ref  : (Sc, BT, 4Hp) f32 scratch: precomputed input projections for the chunk
    h_ref   : (BT, Hp)      f32 scratch: hidden state carried across time chunks
    c_ref   : (BT, Hp)      f32 scratch: cell state carried across time chunks
    """
    tc = pl.program_id(1)
    n_tc = pl.num_programs(1)

    Sc, BT, Ep = x_ref.shape
    Hp4 = w_hh_ref.shape[1]
    Hp = Hp4 // 4
    cdt = w_hh_ref.dtype

    # Reset the carried state at the start of each batch tile's sequence.
    @pl.when(tc == 0)
    def _():
        h_ref[...] = jnp.zeros_like(h_ref)
        c_ref[...] = jnp.zeros_like(c_ref)

    # --- Input projection for the whole chunk: one big MXU matmul, bias folded in.
    # (Sc*BT, Ep) @ (Ep, 4Hp) -> f32; independent of the recurrence, so it is off
    # the serial critical path.
    x2d = x_ref[...].reshape(Sc * BT, Ep)
    gx = jnp.dot(x2d, w_ih_ref[...], preferred_element_type=jnp.float32)
    gx = gx + b_ref[...].astype(jnp.float32)          # broadcast over rows (one add / chunk)
    gx_ref[...] = gx.reshape(Sc, BT, Hp4)

    # --- Serial recurrence: only h @ W_hh remains inside the loop; h, c live in vregs.
    def step(t, carry):
        h, c = carry
        gates = gx_ref[t] + jnp.dot(h.astype(cdt), w_hh_ref[...],
                                    preferred_element_type=jnp.float32)
        # Gate slices are whole 128-lane vregs (Hp multiple of 128); gate math in f32.
        i_g = jax.nn.sigmoid(gates[:, 0 * Hp:1 * Hp])
        f_g = jax.nn.sigmoid(gates[:, 1 * Hp:2 * Hp])
        g_g = jnp.tanh(gates[:, 2 * Hp:3 * Hp])
        o_g = jax.nn.sigmoid(gates[:, 3 * Hp:4 * Hp])
        c_new = f_g * c + i_g * g_g
        h_new = o_g * jnp.tanh(c_new)
        return h_new, c_new

    h_fin, c_fin = lax.fori_loop(0, Sc, step, (h_ref[...], c_ref[...]),
                                 unroll=min(Sc, 8))
    h_ref[...] = h_fin
    c_ref[...] = c_fin

    # --- Final linear layer on the last hidden state, only on the last chunk.
    @pl.when(tc == n_tc - 1)
    def _():
        out_ref[...] = (
            jnp.dot(h_fin.astype(cdt), wfc_ref[...],
                    preferred_element_type=jnp.float32)
            + bfc_ref[...].astype(jnp.float32)
        ).astype(out_ref.dtype)


def lstm_forward(text, params, *, compute_dtype=jnp.float32,
                 batch_tile=None, seq_chunk=None):
    """text: (S, B) int32 token ids -> (B, output_dim) float32 logits.

    compute_dtype=jnp.bfloat16 is recommended on v5e/v6e/v7x for the matmul path
    (f32 accumulation and f32 gate math are kept); f32 default matches the
    PyTorch/JAX reference to 1e-5.
    """
    emb = params["embedding"]                       # (V, E)
    w_ih = jnp.asarray(params["w_ih"])              # (4H, E)  PyTorch layout
    w_hh = jnp.asarray(params["w_hh"])              # (4H, H)
    b = params["b_ih"] + params["b_hh"]             # (4H,)
    w_fc = jnp.asarray(params["w_fc"])              # (O, H)
    b_fc = params["b_fc"]                           # (O,)

    S, B = text.shape
    E = emb.shape[1]
    H = w_hh.shape[1]
    O = w_fc.shape[0]

    itemsize = jnp.dtype(compute_dtype).itemsize
    sub = 16 if itemsize == 2 else 8                # bf16 packs 16 rows / sublane tile
    Bp = _round_up(max(B, sub), sub)
    Ep = _round_up(E, 128)
    Hp = _round_up(H, 128)
    Op = _round_up(O, 128)

    # Glue kept in plain JAX: embedding gather + zero-padding + weight repacking.
    x = emb[text].astype(compute_dtype)             # (S, B, E)
    x = jnp.pad(x, ((0, 0), (0, Bp - B), (0, Ep - E)))

    def pad_gate_cols(w_t, rows, rows_pad):
        # (rows, 4H) -> (rows_pad, 4*Hp), each gate block padded to Hp columns.
        out = jnp.zeros((rows_pad, 4 * Hp), jnp.float32)
        for g in range(4):
            out = out.at[:rows, g * Hp:g * Hp + H].set(w_t[:, g * H:(g + 1) * H])
        return out

    w_ih_p = pad_gate_cols(w_ih.T.astype(jnp.float32), E, Ep).astype(compute_dtype)
    w_hh_p = pad_gate_cols(w_hh.T.astype(jnp.float32), H, Hp).astype(compute_dtype)

    b_p = jnp.zeros((1, 4 * Hp), jnp.float32)
    for g in range(4):
        b_p = b_p.at[0, g * Hp:g * Hp + H].set(b[g * H:(g + 1) * H])

    w_fc_p = (jnp.zeros((Hp, Op), jnp.float32)
              .at[:H, :O].set(w_fc.T)).astype(compute_dtype)
    b_fc_p = jnp.zeros((1, Op), jnp.float32).at[0, :O].set(b_fc)

    # Batch tile: default = whole padded batch (largest MXU M, fewest serial replays).
    BT = Bp if batch_tile is None else batch_tile
    assert Bp % BT == 0, "batch_tile must divide the padded batch"
    assert BT % sub == 0, f"batch_tile must be a multiple of {sub} for this dtype"

    # Time chunk: largest divisor of S whose (x block + gates_x scratch) fits a
    # modest per-chunk budget, so 2x double-buffered chunks stay well under VMEM
    # on every generation (v7x has only 64 MiB).
    if seq_chunk is None:
        bytes_per_step = BT * Ep * itemsize + BT * 4 * Hp * 4
        max_steps = max(1, (8 << 20) // bytes_per_step)
        Sc = 1
        for d in range(1, S + 1):
            if S % d == 0 and d <= max_steps:
                Sc = d
    else:
        Sc = seq_chunk
    assert S % Sc == 0, "seq_chunk must divide the sequence length"

    # Scoped-VMEM budget from actual block sizes (inputs/outputs x2 for double
    # buffering + scratch), with headroom; default scoped limit (16/32 MiB) is
    # otherwise the first thing to break at realistic H or S.
    x_blk = Sc * BT * Ep * itemsize
    w_bytes = (Ep * 4 * Hp + Hp * 4 * Hp + Hp * Op) * itemsize + (4 * Hp + Op) * 4
    out_blk = BT * Op * 4
    scratch = Sc * BT * 4 * Hp * 4 + 2 * BT * Hp * 4
    vmem_limit = max(16 << 20, int(1.25 * (2 * (x_blk + w_bytes + out_blk) + scratch)))

    out = pl.pallas_call(
        lstm_kernel,
        out_shape=jax.ShapeDtypeStruct((Bp, Op), jnp.float32),
        grid=(Bp // BT, S // Sc),                    # batch tiles (parallel), time chunks (serial)
        in_specs=[
            pl.BlockSpec((Sc, BT, Ep), lambda bt, tc: (tc, bt, 0)),
            pl.BlockSpec((Ep, 4 * Hp), lambda bt, tc: (0, 0)),
            pl.BlockSpec((Hp, 4 * Hp), lambda bt, tc: (0, 0)),
            pl.BlockSpec((1, 4 * Hp), lambda bt, tc: (0, 0)),
            pl.BlockSpec((Hp, Op), lambda bt, tc: (0, 0)),
            pl.BlockSpec((1, Op), lambda bt, tc: (0, 0)),
        ],
        out_specs=pl.BlockSpec((BT, Op), lambda bt, tc: (bt, 0)),
        scratch_shapes=[
            pltpu.VMEM((Sc, BT, 4 * Hp), jnp.float32),   # gates_x for this chunk
            pltpu.VMEM((BT, Hp), jnp.float32),           # h, carried across chunks
            pltpu.VMEM((BT, Hp), jnp.float32),           # c, carried across chunks
        ],
        compiler_params=pltpu.CompilerParams(
            dimension_semantics=("parallel", "arbitrary"),
            vmem_limit_bytes=vmem_limit),
    )(x, w_ih_p, w_hh_p, b_p, w_fc_p, b_fc_p)

    return out[:B, :O]


def lstm_reference(text, params):
    """Pure-JAX reference matching PyTorch nn.LSTM semantics (gate order i,f,g,o)."""
    x = params["embedding"][text].astype(jnp.float32)        # (S, B, E)
    H = params["w_hh"].shape[1]
    w_ih_t = params["w_ih"].T
    w_hh_t = params["w_hh"].T
    b = params["b_ih"] + params["b_hh"]

    def step(carry, x_t):
        h, c = carry
        gates = x_t @ w_ih_t + h @ w_hh_t + b
        i = jax.nn.sigmoid(gates[:, 0 * H:1 * H])
        f = jax.nn.sigmoid(gates[:, 1 * H:2 * H])
        g = jnp.tanh(gates[:, 2 * H:3 * H])
        o = jax.nn.sigmoid(gates[:, 3 * H:4 * H])
        c = f * c + i * g
        h = o * jnp.tanh(c)
        return (h, c), None

    B = x.shape[1]
    h0 = jnp.zeros((B, H), jnp.float32)
    (h, _), _ = lax.scan(step, (h0, h0), x)
    return h @ params["w_fc"].T + params["b_fc"]


def init_params(key, input_dim, embedding_dim, hidden_dim, output_dim):
    ks = jax.random.split(key, 6)
    k = 1.0 / jnp.sqrt(hidden_dim)
    return {
        "embedding": jax.random.normal(ks[0], (input_dim, embedding_dim), jnp.float32),
        "w_ih": jax.random.uniform(ks[1], (4 * hidden_dim, embedding_dim),
                                   jnp.float32, -k, k),
        "w_hh": jax.random.uniform(ks[2], (4 * hidden_dim, hidden_dim),
                                   jnp.float32, -k, k),
        "b_ih": jax.random.uniform(ks[3], (4 * hidden_dim,), jnp.float32, -k, k),
        "b_hh": jax.random.uniform(ks[4], (4 * hidden_dim,), jnp.float32, -k, k),
        "w_fc": jax.random.uniform(ks[5], (output_dim, hidden_dim),
                                   jnp.float32, -k, k),
        "b_fc": jnp.zeros((output_dim,), jnp.float32),
    }


if __name__ == "__main__":
    INPUT_DIM = 50      # vocab size
    EMBEDDING_DIM = 16
    HIDDEN_DIM = 32
    OUTPUT_DIM = 4
    SEQ_LEN = 8
    BATCH = 2

    key = jax.random.PRNGKey(0)
    pkey, tkey = jax.random.split(key)
    params = init_params(pkey, INPUT_DIM, EMBEDDING_DIM, HIDDEN_DIM, OUTPUT_DIM)
    text = jax.random.randint(tkey, (SEQ_LEN, BATCH), 0, INPUT_DIM, dtype=jnp.int32)

    ref = lstm_reference(text, params)

    # f32 compute path (matches the f32 reference tightly).
    out = jax.block_until_ready(lstm_forward(text, params))
    assert out.shape == (BATCH, OUTPUT_DIM)
    assert jnp.allclose(out, ref, atol=1e-5, rtol=1e-5), "mismatch vs JAX reference (f32)"

    # Exercise the multi-chunk carry path (2 time chunks of 4 steps).
    out_chunked = jax.block_until_ready(lstm_forward(text, params, seq_chunk=4))
    assert jnp.allclose(out_chunked, ref, atol=1e-5, rtol=1e-5), "mismatch (chunked)"

    # bf16-on-MXU path (recommended for v5e/v6e/v7x); gate math stays f32, so
    # only matmul rounding differs -> looser tolerance.
    out_bf16 = jax.block_until_ready(
        lstm_forward(text, params, compute_dtype=jnp.bfloat16))
    assert jnp.allclose(out_bf16, ref, atol=1e-1, rtol=1e-1), "mismatch (bf16)"

    print("KERNEL_OK")
</pallas_src>

<mosaic_0001>
module attributes {stable_mosaic.version = 11 : i64} {
  func.func @lstm_kernel(%arg0: i32, %arg1: i32, %arg2: memref<8x8x128xf32, #tpu.memory_space<vmem>>, %arg3: memref<128x512xf32, #tpu.memory_space<vmem>>, %arg4: memref<128x512xf32, #tpu.memory_space<vmem>>, %arg5: memref<1x512xf32, #tpu.memory_space<vmem>>, %arg6: memref<128x128xf32, #tpu.memory_space<vmem>>, %arg7: memref<1x128xf32, #tpu.memory_space<vmem>>, %arg8: memref<8x128xf32, #tpu.memory_space<vmem>>, %arg9: memref<8x8x512xf32, #tpu.memory_space<vmem>>, %arg10: memref<8x128xf32, #tpu.memory_space<vmem>>, %arg11: memref<8x128xf32, #tpu.memory_space<vmem>>) attributes {dimension_semantics = [#tpu.dimension_semantics<parallel>, #tpu.dimension_semantics<arbitrary>], iteration_bounds = array<i64: 1, 1>, scalar_prefetch = 0 : i64, scratch_operands = 3 : i64, tpu.core_type = #tpu.core_type<tc>, window_params = [{transform_indices = @transform_0, window_bounds = array<i64: 8, 8, 128>}, {pipeline_mode = #tpu.pipeline_mode<synchronous>, transform_indices = @transform_1, window_bounds = array<i64: 128, 512>}, {pipeline_mode = #tpu.pipeline_mode<synchronous>, transform_indices = @transform_2, window_bounds = array<i64: 128, 512>}, {pipeline_mode = #tpu.pipeline_mode<synchronous>, transform_indices = @transform_3, window_bounds = array<i64: 1, 512>}, {pipeline_mode = #tpu.pipeline_mode<synchronous>, transform_indices = @transform_4, window_bounds = array<i64: 128, 128>}, {pipeline_mode = #tpu.pipeline_mode<synchronous>, transform_indices = @transform_5, window_bounds = array<i64: 1, 128>}, {transform_indices = @transform_6, window_bounds = array<i64: 8, 128>}]} {
    %c0_i32 = arith.constant 0 : i32
    %0 = arith.cmpi eq, %arg1, %c0_i32 : i32
    %1 = arith.extui %0 : i1 to i32
    %c0_i32_0 = arith.constant 0 : i32
    %2 = arith.cmpi ne, %1, %c0_i32_0 : i32
    scf.if %2 {
      %cst_85 = arith.constant 0.000000e+00 : f32
      %267 = vector.broadcast %cst_85 : f32 to vector<8x128xf32>
      %c0_86 = arith.constant 0 : index
      %c0_87 = arith.constant 0 : index
      %268 = vector.load %arg10[%c0_86, %c0_87] : memref<8x128xf32, #tpu.memory_space<vmem>>, vector<8x128xf32>
      tpu.vector_store %arg10[%c0_86, %c0_87], %267 {strides = array<i32>} : memref<8x128xf32, #tpu.memory_space<vmem>>, vector<8x128xf32>,
      %cst_88 = arith.constant 0.000000e+00 : f32
      %269 = vector.broadcast %cst_88 : f32 to vector<8x128xf32>
      %c0_89 = arith.constant 0 : index
      %c0_90 = arith.constant 0 : index
      %270 = vector.load %arg11[%c0_89, %c0_90] : memref<8x128xf32, #tpu.memory_space<vmem>>, vector<8x128xf32>
      tpu.vector_store %arg11[%c0_89, %c0_90], %269 {strides = array<i32>} : memref<8x128xf32, #tpu.memory_space<vmem>>, vector<8x128xf32>,
    } else {
    }
    %c0 = arith.constant 0 : index
    %c0_1 = arith.constant 0 : index
    %c0_2 = arith.constant 0 : index
    %3 = vector.load %arg2[%c0, %c0_1, %c0_2] : memref<8x8x128xf32, #tpu.memory_space<vmem>>, vector<8x8x128xf32>
    %4 = vector.shape_cast %3 : vector<8x8x128xf32> to vector<64x128xf32>
    %c0_3 = arith.constant 0 : index
    %c0_4 = arith.constant 0 : index
    %5 = vector.load %arg3[%c0_3, %c0_4] : memref<128x512xf32, #tpu.memory_space<vmem>>, vector<128x512xf32>
    %cst = arith.constant dense<0.000000e+00> : vector<64x512xf32>
    %6 = tpu.matmul %4, %5, %cst {dimension_numbers = #tpu.dot_dimension_numbers<[1], [0], [0], [1], [0, 0, 1, 1], [], []>} : vector<64x128xf32>, vector<128x512xf32>, vector<64x512xf32> -> vector<64x512xf32>
    %c0_5 = arith.constant 0 : index
    %c0_6 = arith.constant 0 : index
    %7 = vector.load %arg5[%c0_5, %c0_6] : memref<1x512xf32, #tpu.memory_space<vmem>>, vector<1x512xf32>
    %8 = vector.broadcast %7 : vector<1x512xf32> to vector<64x512xf32>
    %9 = arith.addf %6, %8 : vector<64x512xf32>
    %10 = vector.shape_cast %9 : vector<64x512xf32> to vector<8x8x512xf32>
    %c0_7 = arith.constant 0 : index
    %c0_8 = arith.constant 0 : index
    %c0_9 = arith.constant 0 : index
    %11 = vector.load %arg9[%c0_7, %c0_8, %c0_9] : memref<8x8x512xf32, #tpu.memory_space<vmem>>, vector<8x8x512xf32>
    tpu.vector_store %arg9[%c0_7, %c0_8, %c0_9], %10 {strides = array<i32>} : memref<8x8x512xf32, #tpu.memory_space<vmem>>, vector<8x8x512xf32>,
    %c0_10 = arith.constant 0 : index
    %c0_11 = arith.constant 0 : index
    %12 = vector.load %arg10[%c0_10, %c0_11] : memref<8x128xf32, #tpu.memory_space<vmem>>, vector<8x128xf32>
    %c0_12 = arith.constant 0 : index
    %c0_13 = arith.constant 0 : index
    %13 = vector.load %arg11[%c0_12, %c0_13] : memref<8x128xf32, #tpu.memory_space<vmem>>, vector<8x128xf32>
    %c0_i32_14 = arith.constant 0 : i32
    %14 = arith.index_cast %c0_i32_14 : i32 to index
    %c0_15 = arith.constant 0 : index
    %c0_16 = arith.constant 0 : index
    %15 = vector.load %arg9[%14, %c0_15, %c0_16] : memref<8x8x512xf32, #tpu.memory_space<vmem>>, vector<1x8x512xf32>
    %16 = vector.shape_cast %15 : vector<1x8x512xf32> to vector<8x512xf32>
    %c0_17 = arith.constant 0 : index
    %c0_18 = arith.constant 0 : index
    %17 = vector.load %arg4[%c0_17, %c0_18] : memref<128x512xf32, #tpu.memory_space<vmem>>, vector<128x512xf32>
    %cst_19 = arith.constant dense<0.000000e+00> : vector<8x512xf32>
    %18 = tpu.matmul %12, %17, %cst_19 {dimension_numbers = #tpu.dot_dimension_numbers<[1], [0], [0], [1], [0, 0, 1, 1], [], []>} : vector<8x128xf32>, vector<128x512xf32>, vector<8x512xf32> -> vector<8x512xf32>
    %19 = arith.addf %16, %18 : vector<8x512xf32>
    %20 = vector.extract_strided_slice %19 {offsets = [0, 0], sizes = [8, 128], strides = [1, 1]} : vector<8x512xf32> to vector<8x128xf32>
    %21 = arith.negf %20 : vector<8x128xf32>
    %22 = math.exp %21 : vector<8x128xf32>
    %cst_20 = arith.constant 1.000000e+00 : f32
    %23 = vector.broadcast %cst_20 : f32 to vector<8x128xf32>
    %24 = arith.addf %23, %22 : vector<8x128xf32>
    %25 = arith.divf %23, %24 : vector<8x128xf32>
    %26 = vector.extract_strided_slice %19 {offsets = [0, 128], sizes = [8, 128], strides = [1, 1]} : vector<8x512xf32> to vector<8x128xf32>
    %27 = arith.negf %26 : vector<8x128xf32>
    %28 = math.exp %27 : vector<8x128xf32>
    %cst_21 = arith.constant 1.000000e+00 : f32
    %29 = vector.broadcast %cst_21 : f32 to vector<8x128xf32>
    %30 = arith.addf %29, %28 : vector<8x128xf32>
    %31 = arith.divf %29, %30 : vector<8x128xf32>
    %32 = vector.extract_strided_slice %19 {offsets = [0, 256], sizes = [8, 128], strides = [1, 1]} : vector<8x512xf32> to vector<8x128xf32>
    %33 = math.tanh %32 : vector<8x128xf32>
    %34 = vector.extract_strided_slice %19 {offsets = [0, 384], sizes = [8, 128], strides = [1, 1]} : vector<8x512xf32> to vector<8x128xf32>
    %35 = arith.negf %34 : vector<8x128xf32>
    %36 = math.exp %35 : vector<8x128xf32>
    %cst_22 = arith.constant 1.000000e+00 : f32
    %37 = vector.broadcast %cst_22 : f32 to vector<8x128xf32>
    %38 = arith.addf %37, %36 : vector<8x128xf32>
    %39 = arith.divf %37, %38 : vector<8x128xf32>
    %40 = arith.mulf %31, %13 : vector<8x128xf32>
    %41 = arith.mulf %25, %33 : vector<8x128xf32>
    %42 = arith.addf %40, %41 : vector<8x128xf32>
    %43 = math.tanh %42 : vector<8x128xf32>
    %44 = arith.mulf %39, %43 : vector<8x128xf32>
    %c1_i32 = arith.constant 1 : i32
    %45 = arith.index_cast %c1_i32 : i32 to index
    %c0_23 = arith.constant 0 : index
    %c0_24 = arith.constant 0 : index
    %46 = vector.load %arg9[%45, %c0_23, %c0_24] : memref<8x8x512xf32, #tpu.memory_space<vmem>>, vector<1x8x512xf32>
    %47 = vector.shape_cast %46 : vector<1x8x512xf32> to vector<8x512xf32>
    %c0_25 = arith.constant 0 : index
    %c0_26 = arith.constant 0 : index
    %48 = vector.load %arg4[%c0_25, %c0_26] : memref<128x512xf32, #tpu.memory_space<vmem>>, vector<128x512xf32>
    %cst_27 = arith.constant dense<0.000000e+00> : vector<8x512xf32>
    %49 = tpu.matmul %44, %48, %cst_27 {dimension_numbers = #tpu.dot_dimension_numbers<[1], [0], [0], [1], [0, 0, 1, 1], [], []>} : vector<8x128xf32>, vector<128x512xf32>, vector<8x512xf32> -> vector<8x512xf32>
    %50 = arith.addf %47, %49 : vector<8x512xf32>
    %51 = vector.extract_strided_slice %50 {offsets = [0, 0], sizes = [8, 128], strides = [1, 1]} : vector<8x512xf32> to vector<8x128xf32>
    %52 = arith.negf %51 : vector<8x128xf32>
    %53 = math.exp %52 : vector<8x128xf32>
    %cst_28 = arith.constant 1.000000e+00 : f32
    %54 = vector.broadcast %cst_28 : f32 to vector<8x128xf32>
    %55 = arith.addf %54, %53 : vector<8x128xf32>
    %56 = arith.divf %54, %55 : vector<8x128xf32>
    %57 = vector.extract_strided_slice %50 {offsets = [0, 128], sizes = [8, 128], strides = [1, 1]} : vector<8x512xf32> to vector<8x128xf32>
    %58 = arith.negf %57 : vector<8x128xf32>
    %59 = math.exp %58 : vector<8x128xf32>
    %cst_29 = arith.constant 1.000000e+00 : f32
    %60 = vector.broadcast %cst_29 : f32 to vector<8x128xf32>
    %61 = arith.addf %60, %59 : vector<8x128xf32>
    %62 = arith.divf %60, %61 : vector<8x128xf32>
    %63 = vector.extract_strided_slice %50 {offsets = [0, 256], sizes = [8, 128], strides = [1, 1]} : vector<8x512xf32> to vector<8x128xf32>
    %64 = math.tanh %63 : vector<8x128xf32>
    %65 = vector.extract_strided_slice %50 {offsets = [0, 384], sizes = [8, 128], strides = [1, 1]} : vector<8x512xf32> to vector<8x128xf32>
    %66 = arith.negf %65 : vector<8x128xf32>
    %67 = math.exp %66 : vector<8x128xf32>
    %cst_30 = arith.constant 1.000000e+00 : f32
    %68 = vector.broadcast %cst_30 : f32 to vector<8x128xf32>
    %69 = arith.addf %68, %67 : vector<8x128xf32>
    %70 = arith.divf %68, %69 : vector<8x128xf32>
    %71 = arith.mulf %62, %42 : vector<8x128xf32>
    %72 = arith.mulf %56, %64 : vector<8x128xf32>
    %73 = arith.addf %71, %72 : vector<8x128xf32>
    %74 = math.tanh %73 : vector<8x128xf32>
    %75 = arith.mulf %70, %74 : vector<8x128xf32>
    %c2_i32 = arith.constant 2 : i32
    %76 = arith.index_cast %c2_i32 : i32 to index
    %c0_31 = arith.constant 0 : index
    %c0_32 = arith.constant 0 : index
    %77 = vector.load %arg9[%76, %c0_31, %c0_32] : memref<8x8x512xf32, #tpu.memory_space<vmem>>, vector<1x8x512xf32>
    %78 = vector.shape_cast %77 : vector<1x8x512xf32> to vector<8x512xf32>
    %c0_33 = arith.constant 0 : index
    %c0_34 = arith.constant 0 : index
    %79 = vector.load %arg4[%c0_33, %c0_34] : memref<128x512xf32, #tpu.memory_space<vmem>>, vector<128x512xf32>
    %cst_35 = arith.constant dense<0.000000e+00> : vector<8x512xf32>
    %80 = tpu.matmul %75, %79, %cst_35 {dimension_numbers = #tpu.dot_dimension_numbers<[1], [0], [0], [1], [0, 0, 1, 1], [], []>} : vector<8x128xf32>, vector<128x512xf32>, vector<8x512xf32> -> vector<8x512xf32>
    %81 = arith.addf %78, %80 : vector<8x512xf32>
    %82 = vector.extract_strided_slice %81 {offsets = [0, 0], sizes = [8, 128], strides = [1, 1]} : vector<8x512xf32> to vector<8x128xf32>
    %83 = arith.negf %82 : vector<8x128xf32>
    %84 = math.exp %83 : vector<8x128xf32>
    %cst_36 = arith.constant 1.000000e+00 : f32
    %85 = vector.broadcast %cst_36 : f32 to vector<8x128xf32>
    %86 = arith.addf %85, %84 : vector<8x128xf32>
    %87 = arith.divf %85, %86 : vector<8x128xf32>
    %88 = vector.extract_strided_slice %81 {offsets = [0, 128], sizes = [8, 128], strides = [1, 1]} : vector<8x512xf32> to vector<8x128xf32>
    %89 = arith.negf %88 : vector<8x128xf32>
    %90 = math.exp %89 : vector<8x128xf32>
    %cst_37 = arith.constant 1.000000e+00 : f32
    %91 = vector.broadcast %cst_37 : f32 to vector<8x128xf32>
    %92 = arith.addf %91, %90 : vector<8x128xf32>
    %93 = arith.divf %91, %92 : vector<8x128xf32>
    %94 = vector.extract_strided_slice %81 {offsets = [0, 256], sizes = [8, 128], strides = [1, 1]} : vector<8x512xf32> to vector<8x128xf32>
    %95 = math.tanh %94 : vector<8x128xf32>
    %96 = vector.extract_strided_slice %81 {offsets = [0, 384], sizes = [8, 128], strides = [1, 1]} : vector<8x512xf32> to vector<8x128xf32>
    %97 = arith.negf %96 : vector<8x128xf32>
    %98 = math.exp %97 : vector<8x128xf32>
    %cst_38 = arith.constant 1.000000e+00 : f32
    %99 = vector.broadcast %cst_38 : f32 to vector<8x128xf32>
    %100 = arith.addf %99, %98 : vector<8x128xf32>
    %101 = arith.divf %99, %100 : vector<8x128xf32>
    %102 = arith.mulf %93, %73 : vector<8x128xf32>
    %103 = arith.mulf %87, %95 : vector<8x128xf32>
    %104 = arith.addf %102, %103 : vector<8x128xf32>
    %105 = math.tanh %104 : vector<8x128xf32>
    %106 = arith.mulf %101, %105 : vector<8x128xf32>
    %c3_i32 = arith.constant 3 : i32
    %107 = arith.index_cast %c3_i32 : i32 to index
    %c0_39 = arith.constant 0 : index
    %c0_40 = arith.constant 0 : index
    %108 = vector.load %arg9[%107, %c0_39, %c0_40] : memref<8x8x512xf32, #tpu.memory_space<vmem>>, vector<1x8x512xf32>
    %109 = vector.shape_cast %108 : vector<1x8x512xf32> to vector<8x512xf32>
    %c0_41 = arith.constant 0 : index
    %c0_42 = arith.constant 0 : index
    %110 = vector.load %arg4[%c0_41, %c0_42] : memref<128x512xf32, #tpu.memory_space<vmem>>, vector<128x512xf32>
    %cst_43 = arith.constant dense<0.000000e+00> : vector<8x512xf32>
    %111 = tpu.matmul %106, %110, %cst_43 {dimension_numbers = #tpu.dot_dimension_numbers<[1], [0], [0], [1], [0, 0, 1, 1], [], []>} : vector<8x128xf32>, vector<128x512xf32>, vector<8x512xf32> -> vector<8x512xf32>
    %112 = arith.addf %109, %111 : vector<8x512xf32>
    %113 = vector.extract_strided_slice %112 {offsets = [0, 0], sizes = [8, 128], strides = [1, 1]} : vector<8x512xf32> to vector<8x128xf32>
    %114 = arith.negf %113 : vector<8x128xf32>
    %115 = math.exp %114 : vector<8x128xf32>
    %cst_44 = arith.constant 1.000000e+00 : f32
    %116 = vector.broadcast %cst_44 : f32 to vector<8x128xf32>
    %117 = arith.addf %116, %115 : vector<8x128xf32>
    %118 = arith.divf %116, %117 : vector<8x128xf32>
    %119 = vector.extract_strided_slice %112 {offsets = [0, 128], sizes = [8, 128], strides = [1, 1]} : vector<8x512xf32> to vector<8x128xf32>
    %120 = arith.negf %119 : vector<8x128xf32>
    %121 = math.exp %120 : vector<8x128xf32>
    %cst_45 = arith.constant 1.000000e+00 : f32
    %122 = vector.broadcast %cst_45 : f32 to vector<8x128xf32>
    %123 = arith.addf %122, %121 : vector<8x128xf32>
    %124 = arith.divf %122, %123 : vector<8x128xf32>
    %125 = vector.extract_strided_slice %112 {offsets = [0, 256], sizes = [8, 128], strides = [1, 1]} : vector<8x512xf32> to vector<8x128xf32>
    %126 = math.tanh %125 : vector<8x128xf32>
    %127 = vector.extract_strided_slice %112 {offsets = [0, 384], sizes = [8, 128], strides = [1, 1]} : vector<8x512xf32> to vector<8x128xf32>
    %128 = arith.negf %127 : vector<8x128xf32>
    %129 = math.exp %128 : vector<8x128xf32>
    %cst_46 = arith.constant 1.000000e+00 : f32
    %130 = vector.broadcast %cst_46 : f32 to vector<8x128xf32>
    %131 = arith.addf %130, %129 : vector<8x128xf32>
    %132 = arith.divf %130, %131 : vector<8x128xf32>
    %133 = arith.mulf %124, %104 : vector<8x128xf32>
    %134 = arith.mulf %118, %126 : vector<8x128xf32>
    %135 = arith.addf %133, %134 : vector<8x128xf32>
    %136 = math.tanh %135 : vector<8x128xf32>
    %137 = arith.mulf %132, %136 : vector<8x128xf32>
    %c4_i32 = arith.constant 4 : i32
    %138 = arith.index_cast %c4_i32 : i32 to index
    %c0_47 = arith.constant 0 : index
    %c0_48 = arith.constant 0 : index
    %139 = vector.load %arg9[%138, %c0_47, %c0_48] : memref<8x8x512xf32, #tpu.memory_space<vmem>>, vector<1x8x512xf32>
    %140 = vector.shape_cast %139 : vector<1x8x512xf32> to vector<8x512xf32>
    %c0_49 = arith.constant 0 : index
    %c0_50 = arith.constant 0 : index
    %141 = vector.load %arg4[%c0_49, %c0_50] : memref<128x512xf32, #tpu.memory_space<vmem>>, vector<128x512xf32>
    %cst_51 = arith.constant dense<0.000000e+00> : vector<8x512xf32>
    %142 = tpu.matmul %137, %141, %cst_51 {dimension_numbers = #tpu.dot_dimension_numbers<[1], [0], [0], [1], [0, 0, 1, 1], [], []>} : vector<8x128xf32>, vector<128x512xf32>, vector<8x512xf32> -> vector<8x512xf32>
    %143 = arith.addf %140, %142 : vector<8x512xf32>
    %144 = vector.extract_strided_slice %143 {offsets = [0, 0], sizes = [8, 128], strides = [1, 1]} : vector<8x512xf32> to vector<8x128xf32>
    %145 = arith.negf %144 : vector<8x128xf32>
    %146 = math.exp %145 : vector<8x128xf32>
    %cst_52 = arith.constant 1.000000e+00 : f32
    %147 = vector.broadcast %cst_52 : f32 to vector<8x128xf32>
    %148 = arith.addf %147, %146 : vector<8x128xf32>
    %149 = arith.divf %147, %148 : vector<8x128xf32>
    %150 = vector.extract_strided_slice %143 {offsets = [0, 128], sizes = [8, 128], strides = [1, 1]} : vector<8x512xf32> to vector<8x128xf32>
    %151 = arith.negf %150 : vector<8x128xf32>
    %152 = math.exp %151 : vector<8x128xf32>
    %cst_53 = arith.constant 1.000000e+00 : f32
    %153 = vector.broadcast %cst_53 : f32 to vector<8x128xf32>
    %154 = arith.addf %153, %152 : vector<8x128xf32>
    %155 = arith.divf %153, %154 : vector<8x128xf32>
    %156 = vector.extract_strided_slice %143 {offsets = [0, 256], sizes = [8, 128], strides = [1, 1]} : vector<8x512xf32> to vector<8x128xf32>
    %157 = math.tanh %156 : vector<8x128xf32>
    %158 = vector.extract_strided_slice %143 {offsets = [0, 384], sizes = [8, 128], strides = [1, 1]} : vector<8x512xf32> to vector<8x128xf32>
    %159 = arith.negf %158 : vector<8x128xf32>
    %160 = math.exp %159 : vector<8x128xf32>
    %cst_54 = arith.constant 1.000000e+00 : f32
    %161 = vector.broadcast %cst_54 : f32 to vector<8x128xf32>
    %162 = arith.addf %161, %160 : vector<8x128xf32>
    %163 = arith.divf %161, %162 : vector<8x128xf32>
    %164 = arith.mulf %155, %135 : vector<8x128xf32>
    %165 = arith.mulf %149, %157 : vector<8x128xf32>
    %166 = arith.addf %164, %165 : vector<8x128xf32>
    %167 = math.tanh %166 : vector<8x128xf32>
    %168 = arith.mulf %163, %167 : vector<8x128xf32>
    %c5_i32 = arith.constant 5 : i32
    %169 = arith.index_cast %c5_i32 : i32 to index
    %c0_55 = arith.constant 0 : index
    %c0_56 = arith.constant 0 : index
    %170 = vector.load %arg9[%169, %c0_55, %c0_56] : memref<8x8x512xf32, #tpu.memory_space<vmem>>, vector<1x8x512xf32>
    %171 = vector.shape_cast %170 : vector<1x8x512xf32> to vector<8x512xf32>
    %c0_57 = arith.constant 0 : index
    %c0_58 = arith.constant 0 : index
    %172 = vector.load %arg4[%c0_57, %c0_58] : memref<128x512xf32, #tpu.memory_space<vmem>>, vector<128x512xf32>
    %cst_59 = arith.constant dense<0.000000e+00> : vector<8x512xf32>
    %173 = tpu.matmul %168, %172, %cst_59 {dimension_numbers = #tpu.dot_dimension_numbers<[1], [0], [0], [1], [0, 0, 1, 1], [], []>} : vector<8x128xf32>, vector<128x512xf32>, vector<8x512xf32> -> vector<8x512xf32>
    %174 = arith.addf %171, %173 : vector<8x512xf32>
    %175 = vector.extract_strided_slice %174 {offsets = [0, 0], sizes = [8, 128], strides = [1, 1]} : vector<8x512xf32> to vector<8x128xf32>
    %176 = arith.negf %175 : vector<8x128xf32>
    %177 = math.exp %176 : vector<8x128xf32>
    %cst_60 = arith.constant 1.000000e+00 : f32
    %178 = vector.broadcast %cst_60 : f32 to vector<8x128xf32>
    %179 = arith.addf %178, %177 : vector<8x128xf32>
    %180 = arith.divf %178, %179 : vector<8x128xf32>
    %181 = vector.extract_strided_slice %174 {offsets = [0, 128], sizes = [8, 128], strides = [1, 1]} : vector<8x512xf32> to vector<8x128xf32>
    %182 = arith.negf %181 : vector<8x128xf32>
    %183 = math.exp %182 : vector<8x128xf32>
    %cst_61 = arith.constant 1.000000e+00 : f32
    %184 = vector.broadcast %cst_61 : f32 to vector<8x128xf32>
    %185 = arith.addf %184, %183 : vector<8x128xf32>
    %186 = arith.divf %184, %185 : vector<8x128xf32>
    %187 = vector.extract_strided_slice %174 {offsets = [0, 256], sizes = [8, 128], strides = [1, 1]} : vector<8x512xf32> to vector<8x128xf32>
    %188 = math.tanh %187 : vector<8x128xf32>
    %189 = vector.extract_strided_slice %174 {offsets = [0, 384], sizes = [8, 128], strides = [1, 1]} : vector<8x512xf32> to vector<8x128xf32>
    %190 = arith.negf %189 : vector<8x128xf32>
    %191 = math.exp %190 : vector<8x128xf32>
    %cst_62 = arith.constant 1.000000e+00 : f32
    %192 = vector.broadcast %cst_62 : f32 to vector<8x128xf32>
    %193 = arith.addf %192, %191 : vector<8x128xf32>
    %194 = arith.divf %192, %193 : vector<8x128xf32>
    %195 = arith.mulf %186, %166 : vector<8x128xf32>
    %196 = arith.mulf %180, %188 : vector<8x128xf32>
    %197 = arith.addf %195, %196 : vector<8x128xf32>
    %198 = math.tanh %197 : vector<8x128xf32>
    %199 = arith.mulf %194, %198 : vector<8x128xf32>
    %c6_i32 = arith.constant 6 : i32
    %200 = arith.index_cast %c6_i32 : i32 to index
    %c0_63 = arith.constant 0 : index
    %c0_64 = arith.constant 0 : index
    %201 = vector.load %arg9[%200, %c0_63, %c0_64] : memref<8x8x512xf32, #tpu.memory_space<vmem>>, vector<1x8x512xf32>
    %202 = vector.shape_cast %201 : vector<1x8x512xf32> to vector<8x512xf32>
    %c0_65 = arith.constant 0 : index
    %c0_66 = arith.constant 0 : index
    %203 = vector.load %arg4[%c0_65, %c0_66] : memref<128x512xf32, #tpu.memory_space<vmem>>, vector<128x512xf32>
    %cst_67 = arith.constant dense<0.000000e+00> : vector<8x512xf32>
    %204 = tpu.matmul %199, %203, %cst_67 {dimension_numbers = #tpu.dot_dimension_numbers<[1], [0], [0], [1], [0, 0, 1, 1], [], []>} : vector<8x128xf32>, vector<128x512xf32>, vector<8x512xf32> -> vector<8x512xf32>
    %205 = arith.addf %202, %204 : vector<8x512xf32>
    %206 = vector.extract_strided_slice %205 {offsets = [0, 0], sizes = [8, 128], strides = [1, 1]} : vector<8x512xf32> to vector<8x128xf32>
    %207 = arith.negf %206 : vector<8x128xf32>
    %208 = math.exp %207 : vector<8x128xf32>
    %cst_68 = arith.constant 1.000000e+00 : f32
    %209 = vector.broadcast %cst_68 : f32 to vector<8x128xf32>
    %210 = arith.addf %209, %208 : vector<8x128xf32>
    %211 = arith.divf %209, %210 : vector<8x128xf32>
    %212 = vector.extract_strided_slice %205 {offsets = [0, 128], sizes = [8, 128], strides = [1, 1]} : vector<8x512xf32> to vector<8x128xf32>
    %213 = arith.negf %212 : vector<8x128xf32>
    %214 = math.exp %213 : vector<8x128xf32>
    %cst_69 = arith.constant 1.000000e+00 : f32
    %215 = vector.broadcast %cst_69 : f32 to vector<8x128xf32>
    %216 = arith.addf %215, %214 : vector<8x128xf32>
    %217 = arith.divf %215, %216 : vector<8x128xf32>
    %218 = vector.extract_strided_slice %205 {offsets = [0, 256], sizes = [8, 128], strides = [1, 1]} : vector<8x512xf32> to vector<8x128xf32>
    %219 = math.tanh %218 : vector<8x128xf32>
    %220 = vector.extract_strided_slice %205 {offsets = [0, 384], sizes = [8, 128], strides = [1, 1]} : vector<8x512xf32> to vector<8x128xf32>
    %221 = arith.negf %220 : vector<8x128xf32>
    %222 = math.exp %221 : vector<8x128xf32>
    %cst_70 = arith.constant 1.000000e+00 : f32
    %223 = vector.broadcast %cst_70 : f32 to vector<8x128xf32>
    %224 = arith.addf %223, %222 : vector<8x128xf32>
    %225 = arith.divf %223, %224 : vector<8x128xf32>
    %226 = arith.mulf %217, %197 : vector<8x128xf32>
    %227 = arith.mulf %211, %219 : vector<8x128xf32>
    %228 = arith.addf %226, %227 : vector<8x128xf32>
    %229 = math.tanh %228 : vector<8x128xf32>
    %230 = arith.mulf %225, %229 : vector<8x128xf32>
    %c7_i32 = arith.constant 7 : i32
    %231 = arith.index_cast %c7_i32 : i32 to index
    %c0_71 = arith.constant 0 : index
    %c0_72 = arith.constant 0 : index
    %232 = vector.load %arg9[%231, %c0_71, %c0_72] : memref<8x8x512xf32, #tpu.memory_space<vmem>>, vector<1x8x512xf32>
    %233 = vector.shape_cast %232 : vector<1x8x512xf32> to vector<8x512xf32>
    %c0_73 = arith.constant 0 : index
    %c0_74 = arith.constant 0 : index
    %234 = vector.load %arg4[%c0_73, %c0_74] : memref<128x512xf32, #tpu.memory_space<vmem>>, vector<128x512xf32>
    %cst_75 = arith.constant dense<0.000000e+00> : vector<8x512xf32>
    %235 = tpu.matmul %230, %234, %cst_75 {dimension_numbers = #tpu.dot_dimension_numbers<[1], [0], [0], [1], [0, 0, 1, 1], [], []>} : vector<8x128xf32>, vector<128x512xf32>, vector<8x512xf32> -> vector<8x512xf32>
    %236 = arith.addf %233, %235 : vector<8x512xf32>
    %237 = vector.extract_strided_slice %236 {offsets = [0, 0], sizes = [8, 128], strides = [1, 1]} : vector<8x512xf32> to vector<8x128xf32>
    %238 = arith.negf %237 : vector<8x128xf32>
    %239 = math.exp %238 : vector<8x128xf32>
    %cst_76 = arith.constant 1.000000e+00 : f32
    %240 = vector.broadcast %cst_76 : f32 to vector<8x128xf32>
    %241 = arith.addf %240, %239 : vector<8x128xf32>
    %242 = arith.divf %240, %241 : vector<8x128xf32>
    %243 = vector.extract_strided_slice %236 {offsets = [0, 128], sizes = [8, 128], strides = [1, 1]} : vector<8x512xf32> to vector<8x128xf32>
    %244 = arith.negf %243 : vector<8x128xf32>
    %245 = math.exp %244 : vector<8x128xf32>
    %cst_77 = arith.constant 1.000000e+00 : f32
    %246 = vector.broadcast %cst_77 : f32 to vector<8x128xf32>
    %247 = arith.addf %246, %245 : vector<8x128xf32>
    %248 = arith.divf %246, %247 : vector<8x128xf32>
    %249 = vector.extract_strided_slice %236 {offsets = [0, 256], sizes = [8, 128], strides = [1, 1]} : vector<8x512xf32> to vector<8x128xf32>
    %250 = math.tanh %249 : vector<8x128xf32>
    %251 = vector.extract_strided_slice %236 {offsets = [0, 384], sizes = [8, 128], strides = [1, 1]} : vector<8x512xf32> to vector<8x128xf32>
    %252 = arith.negf %251 : vector<8x128xf32>
    %253 = math.exp %252 : vector<8x128xf32>
    %cst_78 = arith.constant 1.000000e+00 : f32
    %254 = vector.broadcast %cst_78 : f32 to vector<8x128xf32>
    %255 = arith.addf %254, %253 : vector<8x128xf32>
    %256 = arith.divf %254, %255 : vector<8x128xf32>
    %257 = arith.mulf %248, %228 : vector<8x128xf32>
    %258 = arith.mulf %242, %250 : vector<8x128xf32>
    %259 = arith.addf %257, %258 : vector<8x128xf32>
    %260 = math.tanh %259 : vector<8x128xf32>
    %261 = arith.mulf %256, %260 : vector<8x128xf32>
    %c8_i32 = arith.constant 8 : i32
    %c0_79 = arith.constant 0 : index
    %c0_80 = arith.constant 0 : index
    %262 = vector.load %arg10[%c0_79, %c0_80] : memref<8x128xf32, #tpu.memory_space<vmem>>, vector<8x128xf32>
    tpu.vector_store %arg10[%c0_79, %c0_80], %261 {strides = array<i32>} : memref<8x128xf32, #tpu.memory_space<vmem>>, vector<8x128xf32>,
    %c0_81 = arith.constant 0 : index
    %c0_82 = arith.constant 0 : index
    %263 = vector.load %arg11[%c0_81, %c0_82] : memref<8x128xf32, #tpu.memory_space<vmem>>, vector<8x128xf32>
    tpu.vector_store %arg11[%c0_81, %c0_82], %259 {strides = array<i32>} : memref<8x128xf32, #tpu.memory_space<vmem>>, vector<8x128xf32>,
    %c0_i32_83 = arith.constant 0 : i32
    %264 = arith.cmpi eq, %arg1, %c0_i32_83 : i32
    %265 = arith.extui %264 : i1 to i32
    %c0_i32_84 = arith.constant 0 : i32
    %266 = arith.cmpi ne, %265, %c0_i32_84 : i32
    scf.if %266 {
      %c0_85 = arith.constant 0 : index
      %c0_86 = arith.constant 0 : index
      %267 = vector.load %arg6[%c0_85, %c0_86] : memref<128x128xf32, #tpu.memory_space<vmem>>, vector<128x128xf32>
      %cst_87 = arith.constant dense<0.000000e+00> : vector<8x128xf32>
      %268 = tpu.matmul %261, %267, %cst_87 {dimension_numbers = #tpu.dot_dimension_numbers<[1], [0], [0], [1], [0, 0, 1, 1], [], []>} : vector<8x128xf32>, vector<128x128xf32>, vector<8x128xf32> -> vector<8x128xf32>
      %c0_88 = arith.constant 0 : index
      %c0_89 = arith.constant 0 : index
      %269 = vector.load %arg7[%c0_88, %c0_89] : memref<1x128xf32, #tpu.memory_space<vmem>>, vector<1x128xf32>
      %270 = vector.broadcast %269 : vector<1x128xf32> to vector<8x128xf32>
      %271 = arith.addf %268, %270 : vector<8x128xf32>
      %c0_90 = arith.constant 0 : index
      %c0_91 = arith.constant 0 : index
      %272 = vector.load %arg8[%c0_90, %c0_91] : memref<8x128xf32, #tpu.memory_space<vmem>>, vector<8x128xf32>
      tpu.vector_store %arg8[%c0_90, %c0_91], %271 {strides = array<i32>} : memref<8x128xf32, #tpu.memory_space<vmem>>, vector<8x128xf32>,
    } else {
    }
    return
  }
  func.func @transform_0(%arg0: i32, %arg1: i32) -> (i32, i32, i32) {
    %c0_i32 = arith.constant 0 : i32
    %c0_i32_0 = arith.constant 0 : i32
    return %arg1, %arg0, %c0_i32 : i32, i32, i32
  }
  func.func @transform_1(%arg0: i32, %arg1: i32) -> (i32, i32) {
    %c0_i32 = arith.constant 0 : i32
    %c0_i32_0 = arith.constant 0 : i32
    %c0_i32_1 = arith.constant 0 : i32
    return %c0_i32, %c0_i32_0 : i32, i32
  }
  func.func @transform_2(%arg0: i32, %arg1: i32) -> (i32, i32) {
    %c0_i32 = arith.constant 0 : i32
    %c0_i32_0 = arith.constant 0 : i32
    %c0_i32_1 = arith.constant 0 : i32
    return %c0_i32, %c0_i32_0 : i32, i32
  }
  func.func @transform_3(%arg0: i32, %arg1: i32) -> (i32, i32) {
    %c0_i32 = arith.constant 0 : i32
    %c0_i32_0 = arith.constant 0 : i32
    %c0_i32_1 = arith.constant 0 : i32
    return %c0_i32, %c0_i32_0 : i32, i32
  }
  func.func @transform_4(%arg0: i32, %arg1: i32) -> (i32, i32) {
    %c0_i32 = arith.constant 0 : i32
    %c0_i32_0 = arith.constant 0 : i32
    %c0_i32_1 = arith.constant 0 : i32
    return %c0_i32, %c0_i32_0 : i32, i32
  }
  func.func @transform_5(%arg0: i32, %arg1: i32) -> (i32, i32) {
    %c0_i32 = arith.constant 0 : i32
    %c0_i32_0 = arith.constant 0 : i32
    %c0_i32_1 = arith.constant 0 : i32
    return %c0_i32, %c0_i32_0 : i32, i32
  }
  func.func @transform_6(%arg0: i32, %arg1: i32) -> (i32, i32) {
    %c0_i32 = arith.constant 0 : i32
    %c0_i32_0 = arith.constant 0 : i32
    return %arg0, %c0_i32 : i32, i32
  }
}

</mosaic_0001>

<llo_original>
// kernel: tpu_custom_call.1
$region0: #{tpu_custom_call.1}
  #allocation0 [shape = 'u32[]', space=smem, size = 0x4, offset = 0x4, fixed_abs, tag = 'smem constant byte address 0x4 - core index']
  #allocation1 [shape = 'u32[144,128]{1,0:T(1,128)}', space=vmem, size = 0x12000, scoped, tag = 'internal scratch']
  #allocation2 [shape = 'f32[8,8,512]{2,1,0:T(8,128)}', space=vmem, size = 0x20000, scoped, tag = 'scratch operand']
  #allocation3 [shape = 'f32[8,128]{1,0:T(8,128)}', space=vmem, size = 0x1000, scoped, tag = 'scratch operand']
  #allocation4 [shape = 'f32[8,128]{1,0:T(8,128)}', space=vmem, size = 0x1000, scoped, tag = 'scratch operand']
  %s0 = inlined_call_operand.hbm [shape: f32[8,8,128], index: 0, kind: input, shape index: {}]
  %s1 = inlined_call_operand.hbm [shape: f32[128,512], index: 1, kind: input, shape index: {}]
  %s2 = inlined_call_operand.hbm [shape: f32[128,512], index: 2, kind: input, shape index: {}]
  %s3 = inlined_call_operand.vmem [shape: f32[1,512], index: 3, kind: input, shape index: {}]
  %s4 = inlined_call_operand.hbm [shape: f32[128,128], index: 4, kind: input, shape index: {}]
  %s5 = inlined_call_operand.vmem [shape: f32[1,128], index: 5, kind: input, shape index: {}]
  %s6 = inlined_call_operand.hbm [shape: f32[8,128], index: 6, kind: output, shape index: {}]
  %s7 = sld [smem:[#allocation0]]
  $region58: #{tpu_custom_call.1} parent=0
    _
  %s9 = ssub.s32 1, %s7
  %s10 = scalar_select 0, %s9, %s7
  $region1: #{tpu_custom_call.1} parent=0
    #allocation5 [shape = 'u8[32768]{0}', space=vmem, size = 0x8000, scoped, tag = 'input window, operand 0, single buffered']
    #allocation6 [shape = 's32[1]{0}', space=sflag, size = 0x4, scoped, tag = 'scoped memory for tpu_custom_call.1']
    #allocation7 [shape = 's32[1]{0}', space=sflag, size = 0x4, scoped, tag = 'scoped memory for tpu_custom_call.1']
    #allocation8 [shape = 'u8[262144]{0}', space=vmem, size = 0x40000, scoped, tag = 'input window, operand 1, single buffered']
    #allocation9 [shape = 's32[1]{0}', space=sflag, size = 0x4, scoped, tag = 'scoped memory for tpu_custom_call.1']
    #allocation10 [shape = 'u8[262144]{0}', space=vmem, size = 0x40000, scoped, tag = 'input window, operand 2, single buffered']
    #allocation11 [shape = 'u8[65536]{0}', space=vmem, size = 0x10000, scoped, tag = 'input window, operand 4, single buffered']
    #allocation12 [shape = 's32[1]{0}', space=sflag, size = 0x4, scoped, tag = 'scoped memory for tpu_custom_call.1']
    #allocation13 [shape = 'u8[4096]{0}', space=vmem, size = 0x1000, scoped, tag = 'output window, operand 0, single buffered']
    %11 = vsyncpa [#allocation6], 0
    %12 = vsyncpa [#allocation9], 0
    %13 = vsyncpa [#allocation12], 0
    %14 = vsyncpa [#allocation7], 0
    // Predicated region
    $region2: #{tpu_custom_call.1} parent=1 // pred_check
      _
    $region3: #{tpu_custom_call.1} parent=1 // pred_check_branch
      %16 = sbr.rel (0) target = $region5
    $region4: #{tpu_custom_call.1} parent=1 // pred_region
      %s18 = ssub.s32 1024, 1024
      %19 = vsyncadd [#allocation6], %s18
      %s20 = sshll.u32 [#allocation5], 4
      %s21 = int_to_ptr.vmem [resolvable:$true] %s20
      %26 = dma.hbm_to_vmem [thread:$0]  %s0, 1024, %s21, [#allocation6], 128, 128, 8
    $region5: #{tpu_custom_call.1} parent=1 // pred_fallthru
      _
    // Predicated region
    $region6: #{tpu_custom_call.1} parent=1 // pred_check
      _
    $region7: #{tpu_custom_call.1} parent=1 // pred_check_branch
      %28 = sbr.rel (0) target = $region9
    $region8: #{tpu_custom_call.1} parent=1 // pred_region
      %s30 = ssub.s32 8192, 8192
      %31 = vsyncadd [#allocation9], %s30
      %s32 = sshll.u32 [#allocation8], 4
      %s33 = int_to_ptr.vmem [resolvable:$true] %s32
      %38 = dma.hbm_to_vmem [thread:$0]  %s1, 8192, %s33, [#allocation9], 512, 512, 32
    $region9: #{tpu_custom_call.1} parent=1 // pred_fallthru
      _
    // Predicated region
    $region10: #{tpu_custom_call.1} parent=1 // pred_check
      _
    $region11: #{tpu_custom_call.1} parent=1 // pred_check_branch
      %40 = sbr.rel (0) target = $region13
    $region12: #{tpu_custom_call.1} parent=1 // pred_region
      %s42 = ssub.s32 8192, 8192
      %43 = vsyncadd [#allocation9], %s42
      %s44 = sshll.u32 [#allocation10], 4
      %s45 = int_to_ptr.vmem [resolvable:$true] %s44
      %50 = dma.hbm_to_vmem [thread:$0]  %s2, 8192, %s45, [#allocation9], 512, 512, 32
    $region13: #{tpu_custom_call.1} parent=1 // pred_fallthru
      _
    // Predicated region
    $region14: #{tpu_custom_call.1} parent=1 // pred_check
      _
    $region15: #{tpu_custom_call.1} parent=1 // pred_check_branch
      %52 = sbr.rel (0) target = $region17
    $region16: #{tpu_custom_call.1} parent=1 // pred_region
      _
    $region17: #{tpu_custom_call.1} parent=1 // pred_fallthru
      _
    // Predicated region
    $region18: #{tpu_custom_call.1} parent=1 // pred_check
      _
    $region19: #{tpu_custom_call.1} parent=1 // pred_check_branch
      %54 = sbr.rel (0) target = $region21
    $region20: #{tpu_custom_call.1} parent=1 // pred_region
      %s56 = ssub.s32 2048, 2048
      %57 = vsyncadd [#allocation12], %s56
      %s58 = sshll.u32 [#allocation11], 4
      %s59 = int_to_ptr.vmem [resolvable:$true] %s58
      %64 = dma.hbm_to_vmem [thread:$0]  %s4, 2048, %s59, [#allocation12], 128, 128, 8
    $region21: #{tpu_custom_call.1} parent=1 // pred_fallthru
      _
    // Predicated region
    $region22: #{tpu_custom_call.1} parent=1 // pred_check
      _
    $region23: #{tpu_custom_call.1} parent=1 // pred_check_branch
      %66 = sbr.rel (0) target = $region25
    $region24: #{tpu_custom_call.1} parent=1 // pred_region
      _
    $region25: #{tpu_custom_call.1} parent=1 // pred_fallthru
      _
    // Predicated region
    $region26: #{tpu_custom_call.1} parent=1 // pred_check
      _
    $region27: #{tpu_custom_call.1} parent=1 // pred_check_branch
      %68 = sbr.rel (0) target = $region29
    $region28: #{tpu_custom_call.1} parent=1 // pred_region
      %69 = dma.done [#allocation6], 1024
    $region29: #{tpu_custom_call.1} parent=1 // pred_fallthru
      _
    // Predicated region
    $region30: #{tpu_custom_call.1} parent=1 // pred_check
      _
    $region31: #{tpu_custom_call.1} parent=1 // pred_check_branch
      %71 = sbr.rel (0) target = $region33
    $region32: #{tpu_custom_call.1} parent=1 // pred_region
      %72 = dma.done [#allocation9], 8192
    $region33: #{tpu_custom_call.1} parent=1 // pred_fallthru
      _
    // Predicated region
    $region34: #{tpu_custom_call.1} parent=1 // pred_check
      _
    $region35: #{tpu_custom_call.1} parent=1 // pred_check_branch
      %74 = sbr.rel (0) target = $region37
    $region36: #{tpu_custom_call.1} parent=1 // pred_region
      %75 = dma.done [#allocation9], 8192
    $region37: #{tpu_custom_call.1} parent=1 // pred_fallthru
      _
    // Predicated region
    $region38: #{tpu_custom_call.1} parent=1 // pred_check
      _
    $region39: #{tpu_custom_call.1} parent=1 // pred_check_branch
      %77 = sbr.rel (0) target = $region41
    $region40: #{tpu_custom_call.1} parent=1 // pred_region
      %78 = dma.done [#allocation12], 2048
    $region41: #{tpu_custom_call.1} parent=1 // pred_fallthru
      _
    %p79 = scmp.eq.s32.totalorder 0, 0
    // Predicated region
    $region42: #{tpu_custom_call.1} parent=1 // pred_check
      %p80 = pneg %p79
    $region43: #{tpu_custom_call.1} parent=1 // pred_check_branch
      %82 = sbr.rel (%p80) target = $region45
    $region44: #{tpu_custom_call.1} parent=1 // pred_region
      %83 = vst [vmem:[#allocation3] sm:$0xff] 0.0
      %84 = vst [vmem:[#allocation4] sm:$0xff] 0.0
    $region45: #{tpu_custom_call.1} parent=1 // pred_fallthru
      _
    %v85 = vld [vmem:[#allocation5] sm:$0xff]
    %v86 = vld [vmem:[#allocation5 + $0x8] sm:$0xff]
    %v87 = vld [vmem:[#allocation5 + $0x10] sm:$0xff]
    %v88 = vld [vmem:[#allocation5 + $0x18] sm:$0xff]
    %v89 = vld [vmem:[#allocation5 + $0x20] sm:$0xff]
    %v90 = vld [vmem:[#allocation5 + $0x28] sm:$0xff]
    %v91 = vld [vmem:[#allocation5 + $0x30] sm:$0xff]
    %v92 = vld [vmem:[#allocation5 + $0x38] sm:$0xff]
    %v93 = vld [vmem:[#allocation8] sm:$0xff]
    %v94 = vld [vmem:[#allocation8 + $0x8] sm:$0xff]
    %v95 = vld [vmem:[#allocation8 + $0x10] sm:$0xff]
    %v96 = vld [vmem:[#allocation8 + $0x18] sm:$0xff]
    %v97 = vld [vmem:[#allocation8 + $0x20] sm:$0xff]
    %v98 = vld [vmem:[#allocation8 + $0x28] sm:$0xff]
    %v99 = vld [vmem:[#allocation8 + $0x30] sm:$0xff]
    %v100 = vld [vmem:[#allocation8 + $0x38] sm:$0xff]
    %v101 = vld [vmem:[#allocation8 + $0x40] sm:$0xff]
    %v102 = vld [vmem:[#allocation8 + $0x48] sm:$0xff]
    %v103 = vld [vmem:[#allocation8 + $0x50] sm:$0xff]
    %v104 = vld [vmem:[#allocation8 + $0x58] sm:$0xff]
    %v105 = vld [vmem:[#allocation8 + $0x60] sm:$0xff]
    %v106 = vld [vmem:[#allocation8 + $0x68] sm:$0xff]
    %v107 = vld [vmem:[#allocation8 + $0x70] sm:$0xff]
    %v108 = vld [vmem:[#allocation8 + $0x78] sm:$0xff]
    %v109 = vld [vmem:[#allocation8 + $0x80] sm:$0xff]
    %v110 = vld [vmem:[#allocation8 + $0x88] sm:$0xff]
    %v111 = vld [vmem:[#allocation8 + $0x90] sm:$0xff]
    %v112 = vld [vmem:[#allocation8 + $0x98] sm:$0xff]
    %v113 = vld [vmem:[#allocation8 + $0xa0] sm:$0xff]
    %v114 = vld [vmem:[#allocation8 + $0xa8] sm:$0xff]
    %v115 = vld [vmem:[#allocation8 + $0xb0] sm:$0xff]
    %v116 = vld [vmem:[#allocation8 + $0xb8] sm:$0xff]
    %v117 = vld [vmem:[#allocation8 + $0xc0] sm:$0xff]
    %v118 = vld [vmem:[#allocation8 + $0xc8] sm:$0xff]
    %v119 = vld [vmem:[#allocation8 + $0xd0] sm:$0xff]
    %v120 = vld [vmem:[#allocation8 + $0xd8] sm:$0xff]
    %v121 = vld [vmem:[#allocation8 + $0xe0] sm:$0xff]
    %v122 = vld [vmem:[#allocation8 + $0xe8] sm:$0xff]
    %v123 = vld [vmem:[#allocation8 + $0xf0] sm:$0xff]
    %v124 = vld [vmem:[#allocation8 + $0xf8] sm:$0xff]
    %v125 = vld [vmem:[#allocation8 + $0x100] sm:$0xff]
    %v126 = vld [vmem:[#allocation8 + $0x108] sm:$0xff]
    %v127 = vld [vmem:[#allocation8 + $0x110] sm:$0xff]
    %v128 = vld [vmem:[#allocation8 + $0x118] sm:$0xff]
    %v129 = vld [vmem:[#allocation8 + $0x120] sm:$0xff]
    %v130 = vld [vmem:[#allocation8 + $0x128] sm:$0xff]
    %v131 = vld [vmem:[#allocation8 + $0x130] sm:$0xff]
    %v132 = vld [vmem:[#allocation8 + $0x138] sm:$0xff]
    %v133 = vld [vmem:[#allocation8 + $0x140] sm:$0xff]
    %v134 = vld [vmem:[#allocation8 + $0x148] sm:$0xff]
    %v135 = vld [vmem:[#allocation8 + $0x150] sm:$0xff]
    %v136 = vld [vmem:[#allocation8 + $0x158] sm:$0xff]
    %v137 = vld [vmem:[#allocation8 + $0x160] sm:$0xff]
    %v138 = vld [vmem:[#allocation8 + $0x168] sm:$0xff]
    %v139 = vld [vmem:[#allocation8 + $0x170] sm:$0xff]
    %v140 = vld [vmem:[#allocation8 + $0x178] sm:$0xff]
    %v141 = vld [vmem:[#allocation8 + $0x180] sm:$0xff]
    %v142 = vld [vmem:[#allocation8 + $0x188] sm:$0xff]
    %v143 = vld [vmem:[#allocation8 + $0x190] sm:$0xff]
    %v144 = vld [vmem:[#allocation8 + $0x198] sm:$0xff]
    %v145 = vld [vmem:[#allocation8 + $0x1a0] sm:$0xff]
    %v146 = vld [vmem:[#allocation8 + $0x1a8] sm:$0xff]
    %v147 = vld [vmem:[#allocation8 + $0x1b0] sm:$0xff]
    %v148 = vld [vmem:[#allocation8 + $0x1b8] sm:$0xff]
    %v149 = vld [vmem:[#allocation8 + $0x1c0] sm:$0xff]
    %v150 = vld [vmem:[#allocation8 + $0x1c8] sm:$0xff]
    %v151 = vld [vmem:[#allocation8 + $0x1d0] sm:$0xff]
    %v152 = vld [vmem:[#allocation8 + $0x1d8] sm:$0xff]
    %v153 = vld [vmem:[#allocation8 + $0x1e0] sm:$0xff]
    %v154 = vld [vmem:[#allocation8 + $0x1e8] sm:$0xff]
    %v155 = vld [vmem:[#allocation8 + $0x1f0] sm:$0xff]
    %v156 = vld [vmem:[#allocation8 + $0x1f8] sm:$0xff]
    %v157 = vld [vmem:[%s3] sm:$0xf]
    %v159 = vlaneseq
    %v160 = vshrl.u32 %v159, 7
    %v161 = vsub.s32 0, %v160
    %v162 = vrot.slane %v157, %v161
    %v163 = vlaneseq
    %v164 = vshrl.u32 %v163, 7
    %v165 = vsub.s32 1, %v164
    %v166 = vrot.slane %v157, %v165
    %v167 = vlaneseq
    %v168 = vshrl.u32 %v167, 7
    %v169 = vsub.s32 2, %v168
    %v170 = vrot.slane %v157, %v169
    %v171 = vlaneseq
    %v172 = vshrl.u32 %v171, 7
    %v173 = vsub.s32 3, %v172
    %v174 = vrot.slane %v157, %v173
    %179 = vmatprep.subr.mxu0 %v154
    %180 = vmatpush1.msra.mxu0 %v153
    %181 = vmatprep.subr.mxu0 %v150
    %182 = vmatpush1.msra.mxu0 %v149
    %183 = vmatprep.subr.mxu0 %v146
    %184 = vmatpush1.msra.mxu0 %v145
    %185 = vmatprep.subr.mxu0 %v142
    %186 = vmatpush1.msra.mxu0 %v141
    %187 = vmatprep.subr.mxu0 %v138
    %188 = vmatpush1.msra.mxu0 %v137
    %189 = vmatprep.subr.mxu0 %v134
    %190 = vmatpush1.msra.mxu0 %v133
    %191 = vmatprep.subr.mxu0 %v130
    %192 = vmatpush1.msra.mxu0 %v129
    %193 = vmatprep.subr.mxu0 %v126
    %194 = vmatpush1.msra.mxu0 %v125
    %195 = vmatprep.subr.mxu0 %v122
    %196 = vmatpush1.msra.mxu0 %v121
    %197 = vmatprep.subr.mxu0 %v118
    %198 = vmatpush1.msra.mxu0 %v117
    %199 = vmatprep.subr.mxu0 %v114
    %200 = vmatpush1.msra.mxu0 %v113
    %201 = vmatprep.subr.mxu0 %v110
    %202 = vmatpush1.msra.mxu0 %v109
    %203 = vmatprep.subr.mxu0 %v106
    %204 = vmatpush1.msra.mxu0 %v105
    %205 = vmatprep.subr.mxu0 %v102
    %206 = vmatpush1.msra.mxu0 %v101
    %207 = vmatprep.subr.mxu0 %v98
    %208 = vmatpush1.msra.mxu0 %v97
    %209 = vmatprep.subr.mxu0 %v94
    %210 = vmatpush1.msra.mxu0 %v93
    %211 = vmatprep.subr.mxu0 0.0
    %212 = vmatpush2.msra.mxu0 0.0
    %213 = vmatprep.subr.mxu0 0.0
    %214 = vmatpush2.msra.mxu0 0.0
    %215 = vmatprep.subr.mxu0 0.0
    %216 = vmatpush2.msra.mxu0 0.0
    %217 = vmatprep.subr.mxu0 0.0
    %218 = vmatpush2.msra.mxu0 0.0
    %219 = vmatprep.subr.mxu0 0.0
    %220 = vmatpush2.msra.mxu0 0.0
    %221 = vmatprep.subr.mxu0 0.0
    %222 = vmatpush2.msra.mxu0 0.0
    %223 = vmatprep.subr.mxu0 0.0
    %224 = vmatpush2.msra.mxu0 0.0
    %225 = vmatprep.subr.mxu0 0.0
    %226 = vmatpush2.msra.mxu0 0.0
    %227 = vmatprep.subr.mxu0 0.0
    %228 = vmatpush2.msra.mxu0 0.0
    %229 = vmatprep.subr.mxu0 0.0
    %230 = vmatpush2.msra.mxu0 0.0
    %231 = vmatprep.subr.mxu0 0.0
    %232 = vmatpush2.msra.mxu0 0.0
    %233 = vmatprep.subr.mxu0 0.0
    %234 = vmatpush2.msra.mxu0 0.0
    %235 = vmatprep.subr.mxu0 0.0
    %236 = vmatpush2.msra.mxu0 0.0
    %237 = vmatprep.subr.mxu0 0.0
    %238 = vmatpush2.msra.mxu0 0.0
    %239 = vmatprep.subr.mxu0 0.0
    %240 = vmatpush2.msra.mxu0 0.0
    %241 = vmatprep.subr.mxu0 0.0
    %242 = vmatpush2.msra.mxu0 0.0
    %243 = vmatprep.mubr.f32.mxu0 0.0
    %244 = vmatmul.mubr.f32.gmra.mxu0 %v85
    %v245 = vpop.f32.mrf.mxu0
    %v246 = vadd.f32 %v162, %v245
    %v247 = vpop.f32.mrf.mxu0
    %v248 = vadd.f32 %v166, %v247
    %249 = vmatprep.mubr.f32.mxu0 0.0
    %250 = vmatmul.mubr.f32.gmra.mxu0 %v86
    %v251 = vpop.f32.mrf.mxu0
    %v252 = vadd.f32 %v162, %v251
    %v253 = vpop.f32.mrf.mxu0
    %v254 = vadd.f32 %v166, %v253
    %255 = vmatprep.mubr.f32.mxu0 0.0
    %256 = vmatmul.mubr.f32.gmra.mxu0 %v87
    %v257 = vpop.f32.mrf.mxu0
    %v258 = vadd.f32 %v162, %v257
    %v259 = vpop.f32.mrf.mxu0
    %v260 = vadd.f32 %v166, %v259
    %261 = vmatprep.mubr.f32.mxu0 0.0
    %262 = vmatmul.mubr.f32.gmra.mxu0 %v88
    %v263 = vpop.f32.mrf.mxu0
    %v264 = vadd.f32 %v162, %v263
    %v265 = vpop.f32.mrf.mxu0
    %v266 = vadd.f32 %v166, %v265
    %267 = vmatprep.mubr.f32.mxu0 0.0
    %268 = vmatmul.mubr.f32.gmra.mxu0 %v89
    %v269 = vpop.f32.mrf.mxu0
    %v270 = vadd.f32 %v162, %v269
    %v271 = vpop.f32.mrf.mxu0
    %v272 = vadd.f32 %v166, %v271
    %273 = vmatprep.mubr.f32.mxu0 0.0
    %274 = vmatmul.mubr.f32.gmra.mxu0 %v90
    %v275 = vpop.f32.mrf.mxu0
    %v276 = vadd.f32 %v162, %v275
    %v277 = vpop.f32.mrf.mxu0
    %v278 = vadd.f32 %v166, %v277
    %279 = vmatprep.mubr.f32.mxu0 0.0
    %280 = vmatmul.mubr.f32.gmra.mxu0 %v91
    %v281 = vpop.f32.mrf.mxu0
    %v282 = vadd.f32 %v162, %v281
    %v283 = vpop.f32.mrf.mxu0
    %v284 = vadd.f32 %v166, %v283
    %285 = vmatprep.mubr.f32.mxu0 0.0
    %286 = vmatmul.mubr.f32.gmra.mxu0 %v92
    %v287 = vpop.f32.mrf.mxu0
    %v288 = vadd.f32 %v162, %v287
    %v289 = vpop.f32.mrf.mxu0
    %v290 = vadd.f32 %v166, %v289
    %291 = vdwg.mxu0
    %292 = vmatprep.subr.mxu0 %v156
    %293 = vmatpush1.msra.mxu0 %v155
    %294 = vmatprep.subr.mxu0 %v152
    %295 = vmatpush1.msra.mxu0 %v151
    %296 = vmatprep.subr.mxu0 %v148
    %297 = vmatpush1.msra.mxu0 %v147
    %298 = vmatprep.subr.mxu0 %v144
    %299 = vmatpush1.msra.mxu0 %v143
    %300 = vmatprep.subr.mxu0 %v140
    %301 = vmatpush1.msra.mxu0 %v139
    %302 = vmatprep.subr.mxu0 %v136
    %303 = vmatpush1.msra.mxu0 %v135
    %304 = vmatprep.subr.mxu0 %v132
    %305 = vmatpush1.msra.mxu0 %v131
    %306 = vmatprep.subr.mxu0 %v128
    %307 = vmatpush1.msra.mxu0 %v127
    %308 = vmatprep.subr.mxu0 %v124
    %309 = vmatpush1.msra.mxu0 %v123
    %310 = vmatprep.subr.mxu0 %v120
    %311 = vmatpush1.msra.mxu0 %v119
    %312 = vmatprep.subr.mxu0 %v116
    %313 = vmatpush1.msra.mxu0 %v115
    %314 = vmatprep.subr.mxu0 %v112
    %315 = vmatpush1.msra.mxu0 %v111
    %316 = vmatprep.subr.mxu0 %v108
    %317 = vmatpush1.msra.mxu0 %v107
    %318 = vmatprep.subr.mxu0 %v104
    %319 = vmatpush1.msra.mxu0 %v103
    %320 = vmatprep.subr.mxu0 %v100
    %321 = vmatpush1.msra.mxu0 %v99
    %322 = vmatprep.subr.mxu0 %v96
    %323 = vmatpush1.msra.mxu0 %v95
    %324 = vmatprep.subr.mxu0 0.0
    %325 = vmatpush2.msra.mxu0 0.0
    %326 = vmatprep.subr.mxu0 0.0
    %327 = vmatpush2.msra.mxu0 0.0
    %328 = vmatprep.subr.mxu0 0.0
    %329 = vmatpush2.msra.mxu0 0.0
    %330 = vmatprep.subr.mxu0 0.0
    %331 = vmatpush2.msra.mxu0 0.0
    %332 = vmatprep.subr.mxu0 0.0
    %333 = vmatpush2.msra.mxu0 0.0
    %334 = vmatprep.subr.mxu0 0.0
    %335 = vmatpush2.msra.mxu0 0.0
    %336 = vmatprep.subr.mxu0 0.0
    %337 = vmatpush2.msra.mxu0 0.0
    %338 = vmatprep.subr.mxu0 0.0
    %339 = vmatpush2.msra.mxu0 0.0
    %340 = vmatprep.subr.mxu0 0.0
    %341 = vmatpush2.msra.mxu0 0.0
    %342 = vmatprep.subr.mxu0 0.0
    %343 = vmatpush2.msra.mxu0 0.0
    %344 = vmatprep.subr.mxu0 0.0
    %345 = vmatpush2.msra.mxu0 0.0
    %346 = vmatprep.subr.mxu0 0.0
    %347 = vmatpush2.msra.mxu0 0.0
    %348 = vmatprep.subr.mxu0 0.0
    %349 = vmatpush2.msra.mxu0 0.0
    %350 = vmatprep.subr.mxu0 0.0
    %351 = vmatpush2.msra.mxu0 0.0
    %352 = vmatprep.subr.mxu0 0.0
    %353 = vmatpush2.msra.mxu0 0.0
    %354 = vmatprep.subr.mxu0 0.0
    %355 = vmatpush2.msra.mxu0 0.0
    %356 = vmatprep.mubr.f32.mxu0 0.0
    %357 = vmatmul.mubr.f32.gmra.mxu0 %v85
    %v358 = vpop.f32.mrf.mxu0
    %v359 = vadd.f32 %v170, %v358
    %v360 = vpop.f32.mrf.mxu0
    %v361 = vadd.f32 %v174, %v360
    %362 = vmatprep.mubr.f32.mxu0 0.0
    %363 = vmatmul.mubr.f32.gmra.mxu0 %v86
    %v364 = vpop.f32.mrf.mxu0
    %v365 = vadd.f32 %v170, %v364
    %v366 = vpop.f32.mrf.mxu0
    %v367 = vadd.f32 %v174, %v366
    %368 = vmatprep.mubr.f32.mxu0 0.0
    %369 = vmatmul.mubr.f32.gmra.mxu0 %v87
    %v370 = vpop.f32.mrf.mxu0
    %v371 = vadd.f32 %v170, %v370
    %v372 = vpop.f32.mrf.mxu0
    %v373 = vadd.f32 %v174, %v372
    %374 = vmatprep.mubr.f32.mxu0 0.0
    %375 = vmatmul.mubr.f32.gmra.mxu0 %v88
    %v376 = vpop.f32.mrf.mxu0
    %v377 = vadd.f32 %v170, %v376
    %v378 = vpop.f32.mrf.mxu0
    %v379 = vadd.f32 %v174, %v378
    %380 = vmatprep.mubr.f32.mxu0 0.0
    %381 = vmatmul.mubr.f32.gmra.mxu0 %v89
    %v382 = vpop.f32.mrf.mxu0
    %v383 = vadd.f32 %v170, %v382
    %v384 = vpop.f32.mrf.mxu0
    %v385 = vadd.f32 %v174, %v384
    %386 = vmatprep.mubr.f32.mxu0 0.0
    %387 = vmatmul.mubr.f32.gmra.mxu0 %v90
    %v388 = vpop.f32.mrf.mxu0
    %v389 = vadd.f32 %v170, %v388
    %v390 = vpop.f32.mrf.mxu0
    %v391 = vadd.f32 %v174, %v390
    %392 = vmatprep.mubr.f32.mxu0 0.0
    %393 = vmatmul.mubr.f32.gmra.mxu0 %v91
    %v394 = vpop.f32.mrf.mxu0
    %v395 = vadd.f32 %v170, %v394
    %v396 = vpop.f32.mrf.mxu0
    %v397 = vadd.f32 %v174, %v396
    %398 = vmatprep.mubr.f32.mxu0 0.0
    %399 = vmatmul.mubr.f32.gmra.mxu0 %v92
    %v400 = vpop.f32.mrf.mxu0
    %v401 = vadd.f32 %v170, %v400
    %v402 = vpop.f32.mrf.mxu0
    %v403 = vadd.f32 %v174, %v402
    %404 = vdwg.mxu0
    %405 = vst [vmem:[#allocation2] sm:$0xff] %v246
    %406 = vst [vmem:[#allocation2 + $0x8] sm:$0xff] %v248
    %407 = vst [vmem:[#allocation2 + $0x10] sm:$0xff] %v359
    %408 = vst [vmem:[#allocation2 + $0x18] sm:$0xff] %v361
    %409 = vst [vmem:[#allocation2 + $0x20] sm:$0xff] %v252
    %410 = vst [vmem:[#allocation2 + $0x28] sm:$0xff] %v254
    %411 = vst [vmem:[#allocation2 + $0x30] sm:$0xff] %v365
    %412 = vst [vmem:[#allocation2 + $0x38] sm:$0xff] %v367
    %413 = vst [vmem:[#allocation2 + $0x40] sm:$0xff] %v258
    %414 = vst [vmem:[#allocation2 + $0x48] sm:$0xff] %v260
    %415 = vst [vmem:[#allocation2 + $0x50] sm:$0xff] %v371
    %416 = vst [vmem:[#allocation2 + $0x58] sm:$0xff] %v373
    %417 = vst [vmem:[#allocation2 + $0x60] sm:$0xff] %v264
    %418 = vst [vmem:[#allocation2 + $0x68] sm:$0xff] %v266
    %419 = vst [vmem:[#allocation2 + $0x70] sm:$0xff] %v377
    %420 = vst [vmem:[#allocation2 + $0x78] sm:$0xff] %v379
    %421 = vst [vmem:[#allocation2 + $0x80] sm:$0xff] %v270
    %422 = vst [vmem:[#allocation2 + $0x88] sm:$0xff] %v272
    %423 = vst [vmem:[#allocation2 + $0x90] sm:$0xff] %v383
    %424 = vst [vmem:[#allocation2 + $0x98] sm:$0xff] %v385
    %425 = vst [vmem:[#allocation2 + $0xa0] sm:$0xff] %v276
    %426 = vst [vmem:[#allocation2 + $0xa8] sm:$0xff] %v278
    %427 = vst [vmem:[#allocation2 + $0xb0] sm:$0xff] %v389
    %428 = vst [vmem:[#allocation2 + $0xb8] sm:$0xff] %v391
    %429 = vst [vmem:[#allocation2 + $0xc0] sm:$0xff] %v282
    %430 = vst [vmem:[#allocation2 + $0xc8] sm:$0xff] %v284
    %431 = vst [vmem:[#allocation2 + $0xd0] sm:$0xff] %v395
    %432 = vst [vmem:[#allocation2 + $0xd8] sm:$0xff] %v397
    %433 = vst [vmem:[#allocation2 + $0xe0] sm:$0xff] %v288
    %434 = vst [vmem:[#allocation2 + $0xe8] sm:$0xff] %v290
    %435 = vst [vmem:[#allocation2 + $0xf0] sm:$0xff] %v401
    %436 = vst [vmem:[#allocation2 + $0xf8] sm:$0xff] %v403
    %v437 = vld [vmem:[#allocation3] sm:$0xff]
    %v438 = vld [vmem:[#allocation4] sm:$0xff]
    %v439 = vld [vmem:[#allocation2] sm:$0xff]
    %v440 = vld [vmem:[#allocation2 + $0x8] sm:$0xff]
    %v441 = vld [vmem:[#allocation2 + $0x10] sm:$0xff]
    %v442 = vld [vmem:[#allocation2 + $0x18] sm:$0xff]
    %v443 = vld [vmem:[#allocation10] sm:$0xff]
    %v444 = vld [vmem:[#allocation10 + $0x8] sm:$0xff]
    %v445 = vld [vmem:[#allocation10 + $0x10] sm:$0xff]
    %v446 = vld [vmem:[#allocation10 + $0x18] sm:$0xff]
    %v447 = vld [vmem:[#allocation10 + $0x20] sm:$0xff]
    %v448 = vld [vmem:[#allocation10 + $0x28] sm:$0xff]
    %v449 = vld [vmem:[#allocation10 + $0x30] sm:$0xff]
    %v450 = vld [vmem:[#allocation10 + $0x38] sm:$0xff]
    %v451 = vld [vmem:[#allocation10 + $0x40] sm:$0xff]
    %v452 = vld [vmem:[#allocation10 + $0x48] sm:$0xff]
    %v453 = vld [vmem:[#allocation10 + $0x50] sm:$0xff]
    %v454 = vld [vmem:[#allocation10 + $0x58] sm:$0xff]
    %v455 = vld [vmem:[#allocation10 + $0x60] sm:$0xff]
    %v456 = vld [vmem:[#allocation10 + $0x68] sm:$0xff]
    %v457 = vld [vmem:[#allocation10 + $0x70] sm:$0xff]
    %v458 = vld [vmem:[#allocation10 + $0x78] sm:$0xff]
    %v459 = vld [vmem:[#allocation10 + $0x80] sm:$0xff]
    %v460 = vld [vmem:[#allocation10 + $0x88] sm:$0xff]
    %v461 = vld [vmem:[#allocation10 + $0x90] sm:$0xff]
    %v462 = vld [vmem:[#allocation10 + $0x98] sm:$0xff]
    %v463 = vld [vmem:[#allocation10 + $0xa0] sm:$0xff]
    %v464 = vld [vmem:[#allocation10 + $0xa8] sm:$0xff]
    %v465 = vld [vmem:[#allocation10 + $0xb0] sm:$0xff]
    %v466 = vld [vmem:[#allocation10 + $0xb8] sm:$0xff]
    %v467 = vld [vmem:[#allocation10 + $0xc0] sm:$0xff]
    %v468 = vld [vmem:[#allocation10 + $0xc8] sm:$0xff]
    %v469 = vld [vmem:[#allocation10 + $0xd0] sm:$0xff]
    %v470 = vld [vmem:[#allocation10 + $0xd8] sm:$0xff]
    %v471 = vld [vmem:[#allocation10 + $0xe0] sm:$0xff]
    %v472 = vld [vmem:[#allocation10 + $0xe8] sm:$0xff]
    %v473 = vld [vmem:[#allocation10 + $0xf0] sm:$0xff]
    %v474 = vld [vmem:[#allocation10 + $0xf8] sm:$0xff]
    %v475 = vld [vmem:[#allocation10 + $0x100] sm:$0xff]
    %v476 = vld [vmem:[#allocation10 + $0x108] sm:$0xff]
    %v477 = vld [vmem:[#allocation10 + $0x110] sm:$0xff]
    %v478 = vld [vmem:[#allocation10 + $0x118] sm:$0xff]
    %v479 = vld [vmem:[#allocation10 + $0x120] sm:$0xff]
    %v480 = vld [vmem:[#allocation10 + $0x128] sm:$0xff]
    %v481 = vld [vmem:[#allocation10 + $0x130] sm:$0xff]
    %v482 = vld [vmem:[#allocation10 + $0x138] sm:$0xff]
    %v483 = vld [vmem:[#allocation10 + $0x140] sm:$0xff]
    %v484 = vld [vmem:[#allocation10 + $0x148] sm:$0xff]
    %v485 = vld [vmem:[#allocation10 + $0x150] sm:$0xff]
    %v486 = vld [vmem:[#allocation10 + $0x158] sm:$0xff]
    %v487 = vld [vmem:[#allocation10 + $0x160] sm:$0xff]
    %v488 = vld [vmem:[#allocation10 + $0x168] sm:$0xff]
    %v489 = vld [vmem:[#allocation10 + $0x170] sm:$0xff]
    %v490 = vld [vmem:[#allocation10 + $0x178] sm:$0xff]
    %v491 = vld [vmem:[#allocation10 + $0x180] sm:$0xff]
    %v492 = vld [vmem:[#allocation10 + $0x188] sm:$0xff]
    %v493 = vld [vmem:[#allocation10 + $0x190] sm:$0xff]
    %v494 = vld [vmem:[#allocation10 + $0x198] sm:$0xff]
    %v495 = vld [vmem:[#allocation10 + $0x1a0] sm:$0xff]
    %v496 = vld [vmem:[#allocation10 + $0x1a8] sm:$0xff]
    %v497 = vld [vmem:[#allocation10 + $0x1b0] sm:$0xff]
    %v498 = vld [vmem:[#allocation10 + $0x1b8] sm:$0xff]
    %v499 = vld [vmem:[#allocation10 + $0x1c0] sm:$0xff]
    %v500 = vld [vmem:[#allocation10 + $0x1c8] sm:$0xff]
    %v501 = vld [vmem:[#allocation10 + $0x1d0] sm:$0xff]
    %v502 = vld [vmem:[#allocation10 + $0x1d8] sm:$0xff]
    %v503 = vld [vmem:[#allocation10 + $0x1e0] sm:$0xff]
    %v504 = vld [vmem:[#allocation10 + $0x1e8] sm:$0xff]
    %v505 = vld [vmem:[#allocation10 + $0x1f0] sm:$0xff]
    %v506 = vld [vmem:[#allocation10 + $0x1f8] sm:$0xff]
    %507 = vmatprep.subr.mxu0 %v504
    %508 = vmatpush1.msra.mxu0 %v503
    %509 = vmatprep.subr.mxu0 %v500
    %510 = vmatpush1.msra.mxu0 %v499
    %511 = vmatprep.subr.mxu0 %v496
    %512 = vmatpush1.msra.mxu0 %v495
    %513 = vmatprep.subr.mxu0 %v492
    %514 = vmatpush1.msra.mxu0 %v491
    %515 = vmatprep.subr.mxu0 %v488
    %516 = vmatpush1.msra.mxu0 %v487
    %517 = vmatprep.subr.mxu0 %v484
    %518 = vmatpush1.msra.mxu0 %v483
    %519 = vmatprep.subr.mxu0 %v480
    %520 = vmatpush1.msra.mxu0 %v479
    %521 = vmatprep.subr.mxu0 %v476
    %522 = vmatpush1.msra.mxu0 %v475
    %523 = vmatprep.subr.mxu0 %v472
    %524 = vmatpush1.msra.mxu0 %v471
    %525 = vmatprep.subr.mxu0 %v468
    %526 = vmatpush1.msra.mxu0 %v467
    %527 = vmatprep.subr.mxu0 %v464
    %528 = vmatpush1.msra.mxu0 %v463
    %529 = vmatprep.subr.mxu0 %v460
    %530 = vmatpush1.msra.mxu0 %v459
    %531 = vmatprep.subr.mxu0 %v456
    %532 = vmatpush1.msra.mxu0 %v455
    %533 = vmatprep.subr.mxu0 %v452
    %534 = vmatpush1.msra.mxu0 %v451
    %535 = vmatprep.subr.mxu0 %v448
    %536 = vmatpush1.msra.mxu0 %v447
    %537 = vmatprep.subr.mxu0 %v444
    %538 = vmatpush1.msra.mxu0 %v443
    %539 = vmatprep.subr.mxu0 0.0
    %540 = vmatpush2.msra.mxu0 0.0
    %541 = vmatprep.subr.mxu0 0.0
    %542 = vmatpush2.msra.mxu0 0.0
    %543 = vmatprep.subr.mxu0 0.0
    %544 = vmatpush2.msra.mxu0 0.0
    %545 = vmatprep.subr.mxu0 0.0
    %546 = vmatpush2.msra.mxu0 0.0
    %547 = vmatprep.subr.mxu0 0.0
    %548 = vmatpush2.msra.mxu0 0.0
    %549 = vmatprep.subr.mxu0 0.0
    %550 = vmatpush2.msra.mxu0 0.0
    %551 = vmatprep.subr.mxu0 0.0
    %552 = vmatpush2.msra.mxu0 0.0
    %553 = vmatprep.subr.mxu0 0.0
    %554 = vmatpush2.msra.mxu0 0.0
    %555 = vmatprep.subr.mxu0 0.0
    %556 = vmatpush2.msra.mxu0 0.0
    %557 = vmatprep.subr.mxu0 0.0
    %558 = vmatpush2.msra.mxu0 0.0
    %559 = vmatprep.subr.mxu0 0.0
    %560 = vmatpush2.msra.mxu0 0.0
    %561 = vmatprep.subr.mxu0 0.0
    %562 = vmatpush2.msra.mxu0 0.0
    %563 = vmatprep.subr.mxu0 0.0
    %564 = vmatpush2.msra.mxu0 0.0
    %565 = vmatprep.subr.mxu0 0.0
    %566 = vmatpush2.msra.mxu0 0.0
    %567 = vmatprep.subr.mxu0 0.0
    %568 = vmatpush2.msra.mxu0 0.0
    %569 = vmatprep.subr.mxu0 0.0
    %570 = vmatpush2.msra.mxu0 0.0
    %571 = vmatprep.mubr.f32.mxu0 0.0
    %572 = vmatmul.mubr.f32.gmra.mxu0 %v437
    %v573 = vpop.f32.mrf.mxu0
    %v574 = vadd.f32 0.0, %v573
    %v575 = vpop.f32.mrf.mxu0
    %v576 = vadd.f32 0.0, %v575
    %577 = vdwg.mxu0
    %578 = vmatprep.subr.mxu0 %v506
    %579 = vmatpush1.msra.mxu0 %v505
    %580 = vmatprep.subr.mxu0 %v502
    %581 = vmatpush1.msra.mxu0 %v501
    %582 = vmatprep.subr.mxu0 %v498
    %583 = vmatpush1.msra.mxu0 %v497
    %584 = vmatprep.subr.mxu0 %v494
    %585 = vmatpush1.msra.mxu0 %v493
    %586 = vmatprep.subr.mxu0 %v490
    %587 = vmatpush1.msra.mxu0 %v489
    %588 = vmatprep.subr.mxu0 %v486
    %589 = vmatpush1.msra.mxu0 %v485
    %590 = vmatprep.subr.mxu0 %v482
    %591 = vmatpush1.msra.mxu0 %v481
    %592 = vmatprep.subr.mxu0 %v478
    %593 = vmatpush1.msra.mxu0 %v477
    %594 = vmatprep.subr.mxu0 %v474
    %595 = vmatpush1.msra.mxu0 %v473
    %596 = vmatprep.subr.mxu0 %v470
    %597 = vmatpush1.msra.mxu0 %v469
    %598 = vmatprep.subr.mxu0 %v466
    %599 = vmatpush1.msra.mxu0 %v465
    %600 = vmatprep.subr.mxu0 %v462
    %601 = vmatpush1.msra.mxu0 %v461
    %602 = vmatprep.subr.mxu0 %v458
    %603 = vmatpush1.msra.mxu0 %v457
    %604 = vmatprep.subr.mxu0 %v454
    %605 = vmatpush1.msra.mxu0 %v453
    %606 = vmatprep.subr.mxu0 %v450
    %607 = vmatpush1.msra.mxu0 %v449
    %608 = vmatprep.subr.mxu0 %v446
    %609 = vmatpush1.msra.mxu0 %v445
    %610 = vmatprep.subr.mxu0 0.0
    %611 = vmatpush2.msra.mxu0 0.0
    %612 = vmatprep.subr.mxu0 0.0
    %613 = vmatpush2.msra.mxu0 0.0
    %614 = vmatprep.subr.mxu0 0.0
    %615 = vmatpush2.msra.mxu0 0.0
    %616 = vmatprep.subr.mxu0 0.0
    %617 = vmatpush2.msra.mxu0 0.0
    %618 = vmatprep.subr.mxu0 0.0
    %619 = vmatpush2.msra.mxu0 0.0
    %620 = vmatprep.subr.mxu0 0.0
    %621 = vmatpush2.msra.mxu0 0.0
    %622 = vmatprep.subr.mxu0 0.0
    %623 = vmatpush2.msra.mxu0 0.0
    %624 = vmatprep.subr.mxu0 0.0
    %625 = vmatpush2.msra.mxu0 0.0
    %626 = vmatprep.subr.mxu0 0.0
    %627 = vmatpush2.msra.mxu0 0.0
    %628 = vmatprep.subr.mxu0 0.0
    %629 = vmatpush2.msra.mxu0 0.0
    %630 = vmatprep.subr.mxu0 0.0
    %631 = vmatpush2.msra.mxu0 0.0
    %632 = vmatprep.subr.mxu0 0.0
    %633 = vmatpush2.msra.mxu0 0.0
    %634 = vmatprep.subr.mxu0 0.0
    %635 = vmatpush2.msra.mxu0 0.0
    %636 = vmatprep.subr.mxu0 0.0
    %637 = vmatpush2.msra.mxu0 0.0
    %638 = vmatprep.subr.mxu0 0.0
    %639 = vmatpush2.msra.mxu0 0.0
    %640 = vmatprep.subr.mxu0 0.0
    %641 = vmatpush2.msra.mxu0 0.0
    %642 = vmatprep.mubr.f32.mxu0 0.0
    %643 = vmatmul.mubr.f32.gmra.mxu0 %v437
    %v644 = vpop.f32.mrf.mxu0
    %v645 = vadd.f32 0.0, %v644
    %v646 = vpop.f32.mrf.mxu0
    %v647 = vadd.f32 0.0, %v646
    %648 = vdwg.mxu0
    %v649 = vadd.f32 %v439, %v574
    %v650 = vadd.f32 %v440, %v576
    %v651 = vadd.f32 %v441, %v645
    %v652 = vadd.f32 %v442, %v647
    %v653 = vxor.u32 %v649, 2147483648
    %v654 = vmul.f32 %v653, 1.442695
    %v655 = vpow.pop %v654
    %v656 = vadd.f32 %v655, 1.0
    %v657 = vrcp.pop %v656
    %v658 = vmul.f32 1.0, %v657
    %v659 = vxor.u32 %v650, 2147483648
    %v660 = vmul.f32 %v659, 1.442695
    %v661 = vpow.pop %v660
    %v662 = vadd.f32 %v661, 1.0
    %v663 = vrcp.pop %v662
    %v664 = vmul.f32 1.0, %v663
    %v665 = vtanh.pop %v651
    %v666 = vxor.u32 %v652, 2147483648
    %v667 = vmul.f32 %v666, 1.442695
    %v668 = vpow.pop %v667
    %v669 = vadd.f32 %v668, 1.0
    %v670 = vrcp.pop %v669
    %v671 = vmul.f32 1.0, %v670
    %v672 = vmul.f32 %v664, %v438
    %v673 = vmul.f32 %v658, %v665
    %v674 = vadd.f32 %v672, %v673
    %v675 = vtanh.pop %v674
    %v676 = vmul.f32 %v671, %v675
    %s677 = scalar_lea.vmem [#allocation2], 32
    %v678 = vld [vmem:[%s677] sm:$0xff]
    %v679 = vld [vmem:[%s677 + $0x8] sm:$0xff]
    %v680 = vld [vmem:[%s677 + $0x10] sm:$0xff]
    %v681 = vld [vmem:[%s677 + $0x18] sm:$0xff]
    %682 = vmatprep.subr.mxu0 %v504
    %683 = vmatpush1.msra.mxu0 %v503
    %684 = vmatprep.subr.mxu0 %v500
    %685 = vmatpush1.msra.mxu0 %v499
    %686 = vmatprep.subr.mxu0 %v496
    %687 = vmatpush1.msra.mxu0 %v495
    %688 = vmatprep.subr.mxu0 %v492
    %689 = vmatpush1.msra.mxu0 %v491
    %690 = vmatprep.subr.mxu0 %v488
    %691 = vmatpush1.msra.mxu0 %v487
    %692 = vmatprep.subr.mxu0 %v484
    %693 = vmatpush1.msra.mxu0 %v483
    %694 = vmatprep.subr.mxu0 %v480
    %695 = vmatpush1.msra.mxu0 %v479
    %696 = vmatprep.subr.mxu0 %v476
    %697 = vmatpush1.msra.mxu0 %v475
    %698 = vmatprep.subr.mxu0 %v472
    %699 = vmatpush1.msra.mxu0 %v471
    %700 = vmatprep.subr.mxu0 %v468
    %701 = vmatpush1.msra.mxu0 %v467
    %702 = vmatprep.subr.mxu0 %v464
    %703 = vmatpush1.msra.mxu0 %v463
    %704 = vmatprep.subr.mxu0 %v460
    %705 = vmatpush1.msra.mxu0 %v459
    %706 = vmatprep.subr.mxu0 %v456
    %707 = vmatpush1.msra.mxu0 %v455
    %708 = vmatprep.subr.mxu0 %v452
    %709 = vmatpush1.msra.mxu0 %v451
    %710 = vmatprep.subr.mxu0 %v448
    %711 = vmatpush1.msra.mxu0 %v447
    %712 = vmatprep.subr.mxu0 %v444
    %713 = vmatpush1.msra.mxu0 %v443
    %714 = vmatprep.subr.mxu0 0.0
    %715 = vmatpush2.msra.mxu0 0.0
    %716 = vmatprep.subr.mxu0 0.0
    %717 = vmatpush2.msra.mxu0 0.0
    %718 = vmatprep.subr.mxu0 0.0
    %719 = vmatpush2.msra.mxu0 0.0
    %720 = vmatprep.subr.mxu0 0.0
    %721 = vmatpush2.msra.mxu0 0.0
    %722 = vmatprep.subr.mxu0 0.0
    %723 = vmatpush2.msra.mxu0 0.0
    %724 = vmatprep.subr.mxu0 0.0
    %725 = vmatpush2.msra.mxu0 0.0
    %726 = vmatprep.subr.mxu0 0.0
    %727 = vmatpush2.msra.mxu0 0.0
    %728 = vmatprep.subr.mxu0 0.0
    %729 = vmatpush2.msra.mxu0 0.0
    %730 = vmatprep.subr.mxu0 0.0
    %731 = vmatpush2.msra.mxu0 0.0
    %732 = vmatprep.subr.mxu0 0.0
    %733 = vmatpush2.msra.mxu0 0.0
    %734 = vmatprep.subr.mxu0 0.0
    %735 = vmatpush2.msra.mxu0 0.0
    %736 = vmatprep.subr.mxu0 0.0
    %737 = vmatpush2.msra.mxu0 0.0
    %738 = vmatprep.subr.mxu0 0.0
    %739 = vmatpush2.msra.mxu0 0.0
    %740 = vmatprep.subr.mxu0 0.0
    %741 = vmatpush2.msra.mxu0 0.0
    %742 = vmatprep.subr.mxu0 0.0
    %743 = vmatpush2.msra.mxu0 0.0
    %744 = vmatprep.subr.mxu0 0.0
    %745 = vmatpush2.msra.mxu0 0.0
    %746 = vmatprep.mubr.f32.mxu0 0.0
    %747 = vmatmul.mubr.f32.gmra.mxu0 %v676
    %v748 = vpop.f32.mrf.mxu0
    %v749 = vadd.f32 0.0, %v748
    %v750 = vpop.f32.mrf.mxu0
    %v751 = vadd.f32 0.0, %v750
    %752 = vdwg.mxu0
    %753 = vmatprep.subr.mxu0 %v506
    %754 = vmatpush1.msra.mxu0 %v505
    %755 = vmatprep.subr.mxu0 %v502
    %756 = vmatpush1.msra.mxu0 %v501
    %757 = vmatprep.subr.mxu0 %v498
    %758 = vmatpush1.msra.mxu0 %v497
    %759 = vmatprep.subr.mxu0 %v494
    %760 = vmatpush1.msra.mxu0 %v493
    %761 = vmatprep.subr.mxu0 %v490
    %762 = vmatpush1.msra.mxu0 %v489
    %763 = vmatprep.subr.mxu0 %v486
    %764 = vmatpush1.msra.mxu0 %v485
    %765 = vmatprep.subr.mxu0 %v482
    %766 = vmatpush1.msra.mxu0 %v481
    %767 = vmatprep.subr.mxu0 %v478
    %768 = vmatpush1.msra.mxu0 %v477
    %769 = vmatprep.subr.mxu0 %v474
    %770 = vmatpush1.msra.mxu0 %v473
    %771 = vmatprep.subr.mxu0 %v470
    %772 = vmatpush1.msra.mxu0 %v469
    %773 = vmatprep.subr.mxu0 %v466
    %774 = vmatpush1.msra.mxu0 %v465
    %775 = vmatprep.subr.mxu0 %v462
    %776 = vmatpush1.msra.mxu0 %v461
    %777 = vmatprep.subr.mxu0 %v458
    %778 = vmatpush1.msra.mxu0 %v457
    %779 = vmatprep.subr.mxu0 %v454
    %780 = vmatpush1.msra.mxu0 %v453
    %781 = vmatprep.subr.mxu0 %v450
    %782 = vmatpush1.msra.mxu0 %v449
    %783 = vmatprep.subr.mxu0 %v446
    %784 = vmatpush1.msra.mxu0 %v445
    %785 = vmatprep.subr.mxu0 0.0
    %786 = vmatpush2.msra.mxu0 0.0
    %787 = vmatprep.subr.mxu0 0.0
    %788 = vmatpush2.msra.mxu0 0.0
    %789 = vmatprep.subr.mxu0 0.0
    %790 = vmatpush2.msra.mxu0 0.0
    %791 = vmatprep.subr.mxu0 0.0
    %792 = vmatpush2.msra.mxu0 0.0
    %793 = vmatprep.subr.mxu0 0.0
    %794 = vmatpush2.msra.mxu0 0.0
    %795 = vmatprep.subr.mxu0 0.0
    %796 = vmatpush2.msra.mxu0 0.0
    %797 = vmatprep.subr.mxu0 0.0
    %798 = vmatpush2.msra.mxu0 0.0
    %799 = vmatprep.subr.mxu0 0.0
    %800 = vmatpush2.msra.mxu0 0.0
    %801 = vmatprep.subr.mxu0 0.0
    %802 = vmatpush2.msra.mxu0 0.0
    %803 = vmatprep.subr.mxu0 0.0
    %804 = vmatpush2.msra.mxu0 0.0
    %805 = vmatprep.subr.mxu0 0.0
    %806 = vmatpush2.msra.mxu0 0.0
    %807 = vmatprep.subr.mxu0 0.0
    %808 = vmatpush2.msra.mxu0 0.0
    %809 = vmatprep.subr.mxu0 0.0
    %810 = vmatpush2.msra.mxu0 0.0
    %811 = vmatprep.subr.mxu0 0.0
    %812 = vmatpush2.msra.mxu0 0.0
    %813 = vmatprep.subr.mxu0 0.0
    %814 = vmatpush2.msra.mxu0 0.0
    %815 = vmatprep.subr.mxu0 0.0
    %816 = vmatpush2.msra.mxu0 0.0
    %817 = vmatprep.mubr.f32.mxu0 0.0
    %818 = vmatmul.mubr.f32.gmra.mxu0 %v676
    %v819 = vpop.f32.mrf.mxu0
    %v820 = vadd.f32 0.0, %v819
    %v821 = vpop.f32.mrf.mxu0
    %v822 = vadd.f32 0.0, %v821
    %823 = vdwg.mxu0
    %v824 = vadd.f32 %v678, %v749
    %v825 = vadd.f32 %v679, %v751
    %v826 = vadd.f32 %v680, %v820
    %v827 = vadd.f32 %v681, %v822
    %v828 = vxor.u32 %v824, 2147483648
    %v829 = vmul.f32 %v828, 1.442695
    %v830 = vpow.pop %v829
    %v831 = vadd.f32 %v830, 1.0
    %v832 = vrcp.pop %v831
    %v833 = vmul.f32 1.0, %v832
    %v834 = vxor.u32 %v825, 2147483648
    %v835 = vmul.f32 %v834, 1.442695
    %v836 = vpow.pop %v835
    %v837 = vadd.f32 %v836, 1.0
    %v838 = vrcp.pop %v837
    %v839 = vmul.f32 1.0, %v838
    %v840 = vtanh.pop %v826
    %v841 = vxor.u32 %v827, 2147483648
    %v842 = vmul.f32 %v841, 1.442695
    %v843 = vpow.pop %v842
    %v844 = vadd.f32 %v843, 1.0
    %v845 = vrcp.pop %v844
    %v846 = vmul.f32 1.0, %v845
    %v847 = vmul.f32 %v839, %v674
    %v848 = vmul.f32 %v833, %v840
    %v849 = vadd.f32 %v847, %v848
    %v850 = vtanh.pop %v849
    %v851 = vmul.f32 %v846, %v850
    %s852 = scalar_lea.vmem [#allocation2], 64
    %v853 = vld [vmem:[%s852] sm:$0xff]
    %v854 = vld [vmem:[%s852 + $0x8] sm:$0xff]
    %v855 = vld [vmem:[%s852 + $0x10] sm:$0xff]
    %v856 = vld [vmem:[%s852 + $0x18] sm:$0xff]
    %857 = vmatprep.subr.mxu0 %v504
    %858 = vmatpush1.msra.mxu0 %v503
    %859 = vmatprep.subr.mxu0 %v500
    %860 = vmatpush1.msra.mxu0 %v499
    %861 = vmatprep.subr.mxu0 %v496
    %862 = vmatpush1.msra.mxu0 %v495
    %863 = vmatprep.subr.mxu0 %v492
    %864 = vmatpush1.msra.mxu0 %v491
    %865 = vmatprep.subr.mxu0 %v488
    %866 = vmatpush1.msra.mxu0 %v487
    %867 = vmatprep.subr.mxu0 %v484
    %868 = vmatpush1.msra.mxu0 %v483
    %869 = vmatprep.subr.mxu0 %v480
    %870 = vmatpush1.msra.mxu0 %v479
    %871 = vmatprep.subr.mxu0 %v476
    %872 = vmatpush1.msra.mxu0 %v475
    %873 = vmatprep.subr.mxu0 %v472
    %874 = vmatpush1.msra.mxu0 %v471
    %875 = vmatprep.subr.mxu0 %v468
    %876 = vmatpush1.msra.mxu0 %v467
    %877 = vmatprep.subr.mxu0 %v464
    %878 = vmatpush1.msra.mxu0 %v463
    %879 = vmatprep.subr.mxu0 %v460
    %880 = vmatpush1.msra.mxu0 %v459
    %881 = vmatprep.subr.mxu0 %v456
    %882 = vmatpush1.msra.mxu0 %v455
    %883 = vmatprep.subr.mxu0 %v452
    %884 = vmatpush1.msra.mxu0 %v451
    %885 = vmatprep.subr.mxu0 %v448
    %886 = vmatpush1.msra.mxu0 %v447
    %887 = vmatprep.subr.mxu0 %v444
    %888 = vmatpush1.msra.mxu0 %v443
    %889 = vmatprep.subr.mxu0 0.0
    %890 = vmatpush2.msra.mxu0 0.0
    %891 = vmatprep.subr.mxu0 0.0
    %892 = vmatpush2.msra.mxu0 0.0
    %893 = vmatprep.subr.mxu0 0.0
    %894 = vmatpush2.msra.mxu0 0.0
    %895 = vmatprep.subr.mxu0 0.0
    %896 = vmatpush2.msra.mxu0 0.0
    %897 = vmatprep.subr.mxu0 0.0
    %898 = vmatpush2.msra.mxu0 0.0
    %899 = vmatprep.subr.mxu0 0.0
    %900 = vmatpush2.msra.mxu0 0.0
    %901 = vmatprep.subr.mxu0 0.0
    %902 = vmatpush2.msra.mxu0 0.0
    %903 = vmatprep.subr.mxu0 0.0
    %904 = vmatpush2.msra.mxu0 0.0
    %905 = vmatprep.subr.mxu0 0.0
    %906 = vmatpush2.msra.mxu0 0.0
    %907 = vmatprep.subr.mxu0 0.0
    %908 = vmatpush2.msra.mxu0 0.0
    %909 = vmatprep.subr.mxu0 0.0
    %910 = vmatpush2.msra.mxu0 0.0
    %911 = vmatprep.subr.mxu0 0.0
    %912 = vmatpush2.msra.mxu0 0.0
    %913 = vmatprep.subr.mxu0 0.0
    %914 = vmatpush2.msra.mxu0 0.0
    %915 = vmatprep.subr.mxu0 0.0
    %916 = vmatpush2.msra.mxu0 0.0
    %917 = vmatprep.subr.mxu0 0.0
    %918 = vmatpush2.msra.mxu0 0.0
    %919 = vmatprep.subr.mxu0 0.0
    %920 = vmatpush2.msra.mxu0 0.0
    %921 = vmatprep.mubr.f32.mxu0 0.0
    %922 = vmatmul.mubr.f32.gmra.mxu0 %v851
    %v923 = vpop.f32.mrf.mxu0
    %v924 = vadd.f32 0.0, %v923
    %v925 = vpop.f32.mrf.mxu0
    %v926 = vadd.f32 0.0, %v925
    %927 = vdwg.mxu0
    %928 = vmatprep.subr.mxu0 %v506
    %929 = vmatpush1.msra.mxu0 %v505
    %930 = vmatprep.subr.mxu0 %v502
    %931 = vmatpush1.msra.mxu0 %v501
    %932 = vmatprep.subr.mxu0 %v498
    %933 = vmatpush1.msra.mxu0 %v497
    %934 = vmatprep.subr.mxu0 %v494
    %935 = vmatpush1.msra.mxu0 %v493
    %936 = vmatprep.subr.mxu0 %v490
    %937 = vmatpush1.msra.mxu0 %v489
    %938 = vmatprep.subr.mxu0 %v486
    %939 = vmatpush1.msra.mxu0 %v485
    %940 = vmatprep.subr.mxu0 %v482
    %941 = vmatpush1.msra.mxu0 %v481
    %942 = vmatprep.subr.mxu0 %v478
    %943 = vmatpush1.msra.mxu0 %v477
    %944 = vmatprep.subr.mxu0 %v474
    %945 = vmatpush1.msra.mxu0 %v473
    %946 = vmatprep.subr.mxu0 %v470
    %947 = vmatpush1.msra.mxu0 %v469
    %948 = vmatprep.subr.mxu0 %v466
    %949 = vmatpush1.msra.mxu0 %v465
    %950 = vmatprep.subr.mxu0 %v462
    %951 = vmatpush1.msra.mxu0 %v461
    %952 = vmatprep.subr.mxu0 %v458
    %953 = vmatpush1.msra.mxu0 %v457
    %954 = vmatprep.subr.mxu0 %v454
    %955 = vmatpush1.msra.mxu0 %v453
    %956 = vmatprep.subr.mxu0 %v450
    %957 = vmatpush1.msra.mxu0 %v449
    %958 = vmatprep.subr.mxu0 %v446
    %959 = vmatpush1.msra.mxu0 %v445
    %960 = vmatprep.subr.mxu0 0.0
    %961 = vmatpush2.msra.mxu0 0.0
    %962 = vmatprep.subr.mxu0 0.0
    %963 = vmatpush2.msra.mxu0 0.0
    %964 = vmatprep.subr.mxu0 0.0
    %965 = vmatpush2.msra.mxu0 0.0
    %966 = vmatprep.subr.mxu0 0.0
    %967 = vmatpush2.msra.mxu0 0.0
    %968 = vmatprep.subr.mxu0 0.0
    %969 = vmatpush2.msra.mxu0 0.0
    %970 = vmatprep.subr.mxu0 0.0
    %971 = vmatpush2.msra.mxu0 0.0
    %972 = vmatprep.subr.mxu0 0.0
    %973 = vmatpush2.msra.mxu0 0.0
    %974 = vmatprep.subr.mxu0 0.0
    %975 = vmatpush2.msra.mxu0 0.0
    %976 = vmatprep.subr.mxu0 0.0
    %977 = vmatpush2.msra.mxu0 0.0
    %978 = vmatprep.subr.mxu0 0.0
    %979 = vmatpush2.msra.mxu0 0.0
    %980 = vmatprep.subr.mxu0 0.0
    %981 = vmatpush2.msra.mxu0 0.0
    %982 = vmatprep.subr.mxu0 0.0
    %983 = vmatpush2.msra.mxu0 0.0
    %984 = vmatprep.subr.mxu0 0.0
    %985 = vmatpush2.msra.mxu0 0.0
    %986 = vmatprep.subr.mxu0 0.0
    %987 = vmatpush2.msra.mxu0 0.0
    %988 = vmatprep.subr.mxu0 0.0
    %989 = vmatpush2.msra.mxu0 0.0
    %990 = vmatprep.subr.mxu0 0.0
    %991 = vmatpush2.msra.mxu0 0.0
    %992 = vmatprep.mubr.f32.mxu0 0.0
    %993 = vmatmul.mubr.f32.gmra.mxu0 %v851
    %v994 = vpop.f32.mrf.mxu0
    %v995 = vadd.f32 0.0, %v994
    %v996 = vpop.f32.mrf.mxu0
    %v997 = vadd.f32 0.0, %v996
    %998 = vdwg.mxu0
    %v999 = vadd.f32 %v853, %v924
    %v1000 = vadd.f32 %v854, %v926
    %v1001 = vadd.f32 %v855, %v995
    %v1002 = vadd.f32 %v856, %v997
    %v1003 = vxor.u32 %v999, 2147483648
    %v1004 = vmul.f32 %v1003, 1.442695
    %v1005 = vpow.pop %v1004
    %v1006 = vadd.f32 %v1005, 1.0
    %v1007 = vrcp.pop %v1006
    %v1008 = vmul.f32 1.0, %v1007
    %v1009 = vxor.u32 %v1000, 2147483648
    %v1010 = vmul.f32 %v1009, 1.442695
    %v1011 = vpow.pop %v1010
    %v1012 = vadd.f32 %v1011, 1.0
    %v1013 = vrcp.pop %v1012
    %v1014 = vmul.f32 1.0, %v1013
    %v1015 = vtanh.pop %v1001
    %v1016 = vxor.u32 %v1002, 2147483648
    %v1017 = vmul.f32 %v1016, 1.442695
    %v1018 = vpow.pop %v1017
    %v1019 = vadd.f32 %v1018, 1.0
    %v1020 = vrcp.pop %v1019
    %v1021 = vmul.f32 1.0, %v1020
    %v1022 = vmul.f32 %v1014, %v849
    %v1023 = vmul.f32 %v1008, %v1015
    %v1024 = vadd.f32 %v1022, %v1023
    %v1025 = vtanh.pop %v1024
    %v1026 = vmul.f32 %v1021, %v1025
    %s1027 = scalar_lea.vmem [#allocation2], 96
    %v1028 = vld [vmem:[%s1027] sm:$0xff]
    %v1029 = vld [vmem:[%s1027 + $0x8] sm:$0xff]
    %v1030 = vld [vmem:[%s1027 + $0x10] sm:$0xff]
    %v1031 = vld [vmem:[%s1027 + $0x18] sm:$0xff]
    %1032 = vmatprep.subr.mxu0 %v504
    %1033 = vmatpush1.msra.mxu0 %v503
    %1034 = vmatprep.subr.mxu0 %v500
    %1035 = vmatpush1.msra.mxu0 %v499
    %1036 = vmatprep.subr.mxu0 %v496
    %1037 = vmatpush1.msra.mxu0 %v495
    %1038 = vmatprep.subr.mxu0 %v492
    %1039 = vmatpush1.msra.mxu0 %v491
    %1040 = vmatprep.subr.mxu0 %v488
    %1041 = vmatpush1.msra.mxu0 %v487
    %1042 = vmatprep.subr.mxu0 %v484
    %1043 = vmatpush1.msra.mxu0 %v483
    %1044 = vmatprep.subr.mxu0 %v480
    %1045 = vmatpush1.msra.mxu0 %v479
    %1046 = vmatprep.subr.mxu0 %v476
    %1047 = vmatpush1.msra.mxu0 %v475
    %1048 = vmatprep.subr.mxu0 %v472
    %1049 = vmatpush1.msra.mxu0 %v471
    %1050 = vmatprep.subr.mxu0 %v468
    %1051 = vmatpush1.msra.mxu0 %v467
    %1052 = vmatprep.subr.mxu0 %v464
    %1053 = vmatpush1.msra.mxu0 %v463
    %1054 = vmatprep.subr.mxu0 %v460
    %1055 = vmatpush1.msra.mxu0 %v459
    %1056 = vmatprep.subr.mxu0 %v456
    %1057 = vmatpush1.msra.mxu0 %v455
    %1058 = vmatprep.subr.mxu0 %v452
    %1059 = vmatpush1.msra.mxu0 %v451
    %1060 = vmatprep.subr.mxu0 %v448
    %1061 = vmatpush1.msra.mxu0 %v447
    %1062 = vmatprep.subr.mxu0 %v444
    %1063 = vmatpush1.msra.mxu0 %v443
    %1064 = vmatprep.subr.mxu0 0.0
    %1065 = vmatpush2.msra.mxu0 0.0
    %1066 = vmatprep.subr.mxu0 0.0
    %1067 = vmatpush2.msra.mxu0 0.0
    %1068 = vmatprep.subr.mxu0 0.0
    %1069 = vmatpush2.msra.mxu0 0.0
    %1070 = vmatprep.subr.mxu0 0.0
    %1071 = vmatpush2.msra.mxu0 0.0
    %1072 = vmatprep.subr.mxu0 0.0
    %1073 = vmatpush2.msra.mxu0 0.0
    %1074 = vmatprep.subr.mxu0 0.0
    %1075 = vmatpush2.msra.mxu0 0.0
    %1076 = vmatprep.subr.mxu0 0.0
    %1077 = vmatpush2.msra.mxu0 0.0
    %1078 = vmatprep.subr.mxu0 0.0
    %1079 = vmatpush2.msra.mxu0 0.0
    %1080 = vmatprep.subr.mxu0 0.0
    %1081 = vmatpush2.msra.mxu0 0.0
    %1082 = vmatprep.subr.mxu0 0.0
    %1083 = vmatpush2.msra.mxu0 0.0
    %1084 = vmatprep.subr.mxu0 0.0
    %1085 = vmatpush2.msra.mxu0 0.0
    %1086 = vmatprep.subr.mxu0 0.0
    %1087 = vmatpush2.msra.mxu0 0.0
    %1088 = vmatprep.subr.mxu0 0.0
    %1089 = vmatpush2.msra.mxu0 0.0
    %1090 = vmatprep.subr.mxu0 0.0
    %1091 = vmatpush2.msra.mxu0 0.0
    %1092 = vmatprep.subr.mxu0 0.0
    %1093 = vmatpush2.msra.mxu0 0.0
    %1094 = vmatprep.subr.mxu0 0.0
    %1095 = vmatpush2.msra.mxu0 0.0
    %1096 = vmatprep.mubr.f32.mxu0 0.0
    %1097 = vmatmul.mubr.f32.gmra.mxu0 %v1026
    %v1098 = vpop.f32.mrf.mxu0
    %v1099 = vadd.f32 0.0, %v1098
    %v1100 = vpop.f32.mrf.mxu0
    %v1101 = vadd.f32 0.0, %v1100
    %1102 = vdwg.mxu0
    %1103 = vmatprep.subr.mxu0 %v506
    %1104 = vmatpush1.msra.mxu0 %v505
    %1105 = vmatprep.subr.mxu0 %v502
    %1106 = vmatpush1.msra.mxu0 %v501
    %1107 = vmatprep.subr.mxu0 %v498
    %1108 = vmatpush1.msra.mxu0 %v497
    %1109 = vmatprep.subr.mxu0 %v494
    %1110 = vmatpush1.msra.mxu0 %v493
    %1111 = vmatprep.subr.mxu0 %v490
    %1112 = vmatpush1.msra.mxu0 %v489
    %1113 = vmatprep.subr.mxu0 %v486
    %1114 = vmatpush1.msra.mxu0 %v485
    %1115 = vmatprep.subr.mxu0 %v482
    %1116 = vmatpush1.msra.mxu0 %v481
    %1117 = vmatprep.subr.mxu0 %v478
    %1118 = vmatpush1.msra.mxu0 %v477
    %1119 = vmatprep.subr.mxu0 %v474
    %1120 = vmatpush1.msra.mxu0 %v473
    %1121 = vmatprep.subr.mxu0 %v470
    %1122 = vmatpush1.msra.mxu0 %v469
    %1123 = vmatprep.subr.mxu0 %v466
    %1124 = vmatpush1.msra.mxu0 %v465
    %1125 = vmatprep.subr.mxu0 %v462
    %1126 = vmatpush1.msra.mxu0 %v461
    %1127 = vmatprep.subr.mxu0 %v458
    %1128 = vmatpush1.msra.mxu0 %v457
    %1129 = vmatprep.subr.mxu0 %v454
    %1130 = vmatpush1.msra.mxu0 %v453
    %1131 = vmatprep.subr.mxu0 %v450
    %1132 = vmatpush1.msra.mxu0 %v449
    %1133 = vmatprep.subr.mxu0 %v446
    %1134 = vmatpush1.msra.mxu0 %v445
    %1135 = vmatprep.subr.mxu0 0.0
    %1136 = vmatpush2.msra.mxu0 0.0
    %1137 = vmatprep.subr.mxu0 0.0
    %1138 = vmatpush2.msra.mxu0 0.0
    %1139 = vmatprep.subr.mxu0 0.0
    %1140 = vmatpush2.msra.mxu0 0.0
    %1141 = vmatprep.subr.mxu0 0.0
    %1142 = vmatpush2.msra.mxu0 0.0
    %1143 = vmatprep.subr.mxu0 0.0
    %1144 = vmatpush2.msra.mxu0 0.0
    %1145 = vmatprep.subr.mxu0 0.0
    %1146 = vmatpush2.msra.mxu0 0.0
    %1147 = vmatprep.subr.mxu0 0.0
    %1148 = vmatpush2.msra.mxu0 0.0
    %1149 = vmatprep.subr.mxu0 0.0
    %1150 = vmatpush2.msra.mxu0 0.0
    %1151 = vmatprep.subr.mxu0 0.0
    %1152 = vmatpush2.msra.mxu0 0.0
    %1153 = vmatprep.subr.mxu0 0.0
    %1154 = vmatpush2.msra.mxu0 0.0
    %1155 = vmatprep.subr.mxu0 0.0
    %1156 = vmatpush2.msra.mxu0 0.0
    %1157 = vmatprep.subr.mxu0 0.0
    %1158 = vmatpush2.msra.mxu0 0.0
    %1159 = vmatprep.subr.mxu0 0.0
    %1160 = vmatpush2.msra.mxu0 0.0
    %1161 = vmatprep.subr.mxu0 0.0
    %1162 = vmatpush2.msra.mxu0 0.0
    %1163 = vmatprep.subr.mxu0 0.0
    %1164 = vmatpush2.msra.mxu0 0.0
    %1165 = vmatprep.subr.mxu0 0.0
    %1166 = vmatpush2.msra.mxu0 0.0
    %1167 = vmatprep.mubr.f32.mxu0 0.0
    %1168 = vmatmul.mubr.f32.gmra.mxu0 %v1026
    %v1169 = vpop.f32.mrf.mxu0
    %v1170 = vadd.f32 0.0, %v1169
    %v1171 = vpop.f32.mrf.mxu0
    %v1172 = vadd.f32 0.0, %v1171
    %1173 = vdwg.mxu0
    %v1174 = vadd.f32 %v1028, %v1099
    %v1175 = vadd.f32 %v1029, %v1101
    %v1176 = vadd.f32 %v1030, %v1170
    %v1177 = vadd.f32 %v1031, %v1172
    %v1178 = vxor.u32 %v1174, 2147483648
    %v1179 = vmul.f32 %v1178, 1.442695
    %v1180 = vpow.pop %v1179
    %v1181 = vadd.f32 %v1180, 1.0
    %v1182 = vrcp.pop %v1181
    %v1183 = vmul.f32 1.0, %v1182
    %v1184 = vxor.u32 %v1175, 2147483648
    %v1185 = vmul.f32 %v1184, 1.442695
    %v1186 = vpow.pop %v1185
    %v1187 = vadd.f32 %v1186, 1.0
    %v1188 = vrcp.pop %v1187
    %v1189 = vmul.f32 1.0, %v1188
    %v1190 = vtanh.pop %v1176
    %v1191 = vxor.u32 %v1177, 2147483648
    %v1192 = vmul.f32 %v1191, 1.442695
    %v1193 = vpow.pop %v1192
    %v1194 = vadd.f32 %v1193, 1.0
    %v1195 = vrcp.pop %v1194
    %v1196 = vmul.f32 1.0, %v1195
    %v1197 = vmul.f32 %v1189, %v1024
    %v1198 = vmul.f32 %v1183, %v1190
    %v1199 = vadd.f32 %v1197, %v1198
    %v1200 = vtanh.pop %v1199
    %v1201 = vmul.f32 %v1196, %v1200
    %s1202 = scalar_lea.vmem [#allocation2], 128
    %v1203 = vld [vmem:[%s1202] sm:$0xff]
    %v1204 = vld [vmem:[%s1202 + $0x8] sm:$0xff]
    %v1205 = vld [vmem:[%s1202 + $0x10] sm:$0xff]
    %v1206 = vld [vmem:[%s1202 + $0x18] sm:$0xff]
    %1207 = vmatprep.subr.mxu0 %v504
    %1208 = vmatpush1.msra.mxu0 %v503
    %1209 = vmatprep.subr.mxu0 %v500
    %1210 = vmatpush1.msra.mxu0 %v499
    %1211 = vmatprep.subr.mxu0 %v496
    %1212 = vmatpush1.msra.mxu0 %v495
    %1213 = vmatprep.subr.mxu0 %v492
    %1214 = vmatpush1.msra.mxu0 %v491
    %1215 = vmatprep.subr.mxu0 %v488
    %1216 = vmatpush1.msra.mxu0 %v487
    %1217 = vmatprep.subr.mxu0 %v484
    %1218 = vmatpush1.msra.mxu0 %v483
    %1219 = vmatprep.subr.mxu0 %v480
    %1220 = vmatpush1.msra.mxu0 %v479
    %1221 = vmatprep.subr.mxu0 %v476
    %1222 = vmatpush1.msra.mxu0 %v475
    %1223 = vmatprep.subr.mxu0 %v472
    %1224 = vmatpush1.msra.mxu0 %v471
    %1225 = vmatprep.subr.mxu0 %v468
    %1226 = vmatpush1.msra.mxu0 %v467
    %1227 = vmatprep.subr.mxu0 %v464
    %1228 = vmatpush1.msra.mxu0 %v463
    %1229 = vmatprep.subr.mxu0 %v460
    %1230 = vmatpush1.msra.mxu0 %v459
    %1231 = vmatprep.subr.mxu0 %v456
    %1232 = vmatpush1.msra.mxu0 %v455
    %1233 = vmatprep.subr.mxu0 %v452
    %1234 = vmatpush1.msra.mxu0 %v451
    %1235 = vmatprep.subr.mxu0 %v448
    %1236 = vmatpush1.msra.mxu0 %v447
    %1237 = vmatprep.subr.mxu0 %v444
    %1238 = vmatpush1.msra.mxu0 %v443
    %1239 = vmatprep.subr.mxu0 0.0
    %1240 = vmatpush2.msra.mxu0 0.0
    %1241 = vmatprep.subr.mxu0 0.0
    %1242 = vmatpush2.msra.mxu0 0.0
    %1243 = vmatprep.subr.mxu0 0.0
    %1244 = vmatpush2.msra.mxu0 0.0
    %1245 = vmatprep.subr.mxu0 0.0
    %1246 = vmatpush2.msra.mxu0 0.0
    %1247 = vmatprep.subr.mxu0 0.0
    %1248 = vmatpush2.msra.mxu0 0.0
    %1249 = vmatprep.subr.mxu0 0.0
    %1250 = vmatpush2.msra.mxu0 0.0
    %1251 = vmatprep.subr.mxu0 0.0
    %1252 = vmatpush2.msra.mxu0 0.0
    %1253 = vmatprep.subr.mxu0 0.0
    %1254 = vmatpush2.msra.mxu0 0.0
    %1255 = vmatprep.subr.mxu0 0.0
    %1256 = vmatpush2.msra.mxu0 0.0
    %1257 = vmatprep.subr.mxu0 0.0
    %1258 = vmatpush2.msra.mxu0 0.0
    %1259 = vmatprep.subr.mxu0 0.0
    %1260 = vmatpush2.msra.mxu0 0.0
    %1261 = vmatprep.subr.mxu0 0.0
    %1262 = vmatpush2.msra.mxu0 0.0
    %1263 = vmatprep.subr.mxu0 0.0
    %1264 = vmatpush2.msra.mxu0 0.0
    %1265 = vmatprep.subr.mxu0 0.0
    %1266 = vmatpush2.msra.mxu0 0.0
    %1267 = vmatprep.subr.mxu0 0.0
    %1268 = vmatpush2.msra.mxu0 0.0
    %1269 = vmatprep.subr.mxu0 0.0
    %1270 = vmatpush2.msra.mxu0 0.0
    %1271 = vmatprep.mubr.f32.mxu0 0.0
    %1272 = vmatmul.mubr.f32.gmra.mxu0 %v1201
    %v1273 = vpop.f32.mrf.mxu0
    %v1274 = vadd.f32 0.0, %v1273
    %v1275 = vpop.f32.mrf.mxu0
    %v1276 = vadd.f32 0.0, %v1275
    %1277 = vdwg.mxu0
    %1278 = vmatprep.subr.mxu0 %v506
    %1279 = vmatpush1.msra.mxu0 %v505
    %1280 = vmatprep.subr.mxu0 %v502
    %1281 = vmatpush1.msra.mxu0 %v501
    %1282 = vmatprep.subr.mxu0 %v498
    %1283 = vmatpush1.msra.mxu0 %v497
    %1284 = vmatprep.subr.mxu0 %v494
    %1285 = vmatpush1.msra.mxu0 %v493
    %1286 = vmatprep.subr.mxu0 %v490
    %1287 = vmatpush1.msra.mxu0 %v489
    %1288 = vmatprep.subr.mxu0 %v486
    %1289 = vmatpush1.msra.mxu0 %v485
    %1290 = vmatprep.subr.mxu0 %v482
    %1291 = vmatpush1.msra.mxu0 %v481
    %1292 = vmatprep.subr.mxu0 %v478
    %1293 = vmatpush1.msra.mxu0 %v477
    %1294 = vmatprep.subr.mxu0 %v474
    %1295 = vmatpush1.msra.mxu0 %v473
    %1296 = vmatprep.subr.mxu0 %v470
    %1297 = vmatpush1.msra.mxu0 %v469
    %1298 = vmatprep.subr.mxu0 %v466
    %1299 = vmatpush1.msra.mxu0 %v465
    %1300 = vmatprep.subr.mxu0 %v462
    %1301 = vmatpush1.msra.mxu0 %v461
    %1302 = vmatprep.subr.mxu0 %v458
    %1303 = vmatpush1.msra.mxu0 %v457
    %1304 = vmatprep.subr.mxu0 %v454
    %1305 = vmatpush1.msra.mxu0 %v453
    %1306 = vmatprep.subr.mxu0 %v450
    %1307 = vmatpush1.msra.mxu0 %v449
    %1308 = vmatprep.subr.mxu0 %v446
    %1309 = vmatpush1.msra.mxu0 %v445
    %1310 = vmatprep.subr.mxu0 0.0
    %1311 = vmatpush2.msra.mxu0 0.0
    %1312 = vmatprep.subr.mxu0 0.0
    %1313 = vmatpush2.msra.mxu0 0.0
    %1314 = vmatprep.subr.mxu0 0.0
    %1315 = vmatpush2.msra.mxu0 0.0
    %1316 = vmatprep.subr.mxu0 0.0
    %1317 = vmatpush2.msra.mxu0 0.0
    %1318 = vmatprep.subr.mxu0 0.0
    %1319 = vmatpush2.msra.mxu0 0.0
    %1320 = vmatprep.subr.mxu0 0.0
    %1321 = vmatpush2.msra.mxu0 0.0
    %1322 = vmatprep.subr.mxu0 0.0
    %1323 = vmatpush2.msra.mxu0 0.0
    %1324 = vmatprep.subr.mxu0 0.0
    %1325 = vmatpush2.msra.mxu0 0.0
    %1326 = vmatprep.subr.mxu0 0.0
    %1327 = vmatpush2.msra.mxu0 0.0
    %1328 = vmatprep.subr.mxu0 0.0
    %1329 = vmatpush2.msra.mxu0 0.0
    %1330 = vmatprep.subr.mxu0 0.0
    %1331 = vmatpush2.msra.mxu0 0.0
    %1332 = vmatprep.subr.mxu0 0.0
    %1333 = vmatpush2.msra.mxu0 0.0
    %1334 = vmatprep.subr.mxu0 0.0
    %1335 = vmatpush2.msra.mxu0 0.0
    %1336 = vmatprep.subr.mxu0 0.0
    %1337 = vmatpush2.msra.mxu0 0.0
    %1338 = vmatprep.subr.mxu0 0.0
    %1339 = vmatpush2.msra.mxu0 0.0
    %1340 = vmatprep.subr.mxu0 0.0
    %1341 = vmatpush2.msra.mxu0 0.0
    %1342 = vmatprep.mubr.f32.mxu0 0.0
    %1343 = vmatmul.mubr.f32.gmra.mxu0 %v1201
    %v1344 = vpop.f32.mrf.mxu0
    %v1345 = vadd.f32 0.0, %v1344
    %v1346 = vpop.f32.mrf.mxu0
    %v1347 = vadd.f32 0.0, %v1346
    %1348 = vdwg.mxu0
    %v1349 = vadd.f32 %v1203, %v1274
    %v1350 = vadd.f32 %v1204, %v1276
    %v1351 = vadd.f32 %v1205, %v1345
    %v1352 = vadd.f32 %v1206, %v1347
    %v1353 = vxor.u32 %v1349, 2147483648
    %v1354 = vmul.f32 %v1353, 1.442695
    %v1355 = vpow.pop %v1354
    %v1356 = vadd.f32 %v1355, 1.0
    %v1357 = vrcp.pop %v1356
    %v1358 = vmul.f32 1.0, %v1357
    %v1359 = vxor.u32 %v1350, 2147483648
    %v1360 = vmul.f32 %v1359, 1.442695
    %v1361 = vpow.pop %v1360
    %v1362 = vadd.f32 %v1361, 1.0
    %v1363 = vrcp.pop %v1362
    %v1364 = vmul.f32 1.0, %v1363
    %v1365 = vtanh.pop %v1351
    %v1366 = vxor.u32 %v1352, 2147483648
    %v1367 = vmul.f32 %v1366, 1.442695
    %v1368 = vpow.pop %v1367
    %v1369 = vadd.f32 %v1368, 1.0
    %v1370 = vrcp.pop %v1369
    %v1371 = vmul.f32 1.0, %v1370
    %v1372 = vmul.f32 %v1364, %v1199
    %v1373 = vmul.f32 %v1358, %v1365
    %v1374 = vadd.f32 %v1372, %v1373
    %v1375 = vtanh.pop %v1374
    %v1376 = vmul.f32 %v1371, %v1375
    %s1377 = scalar_lea.vmem [#allocation2], 160
    %v1378 = vld [vmem:[%s1377] sm:$0xff]
    %v1379 = vld [vmem:[%s1377 + $0x8] sm:$0xff]
    %v1380 = vld [vmem:[%s1377 + $0x10] sm:$0xff]
    %v1381 = vld [vmem:[%s1377 + $0x18] sm:$0xff]
    %1382 = vmatprep.subr.mxu0 %v504
    %1383 = vmatpush1.msra.mxu0 %v503
    %1384 = vmatprep.subr.mxu0 %v500
    %1385 = vmatpush1.msra.mxu0 %v499
    %1386 = vmatprep.subr.mxu0 %v496
    %1387 = vmatpush1.msra.mxu0 %v495
    %1388 = vmatprep.subr.mxu0 %v492
    %1389 = vmatpush1.msra.mxu0 %v491
    %1390 = vmatprep.subr.mxu0 %v488
    %1391 = vmatpush1.msra.mxu0 %v487
    %1392 = vmatprep.subr.mxu0 %v484
    %1393 = vmatpush1.msra.mxu0 %v483
    %1394 = vmatprep.subr.mxu0 %v480
    %1395 = vmatpush1.msra.mxu0 %v479
    %1396 = vmatprep.subr.mxu0 %v476
    %1397 = vmatpush1.msra.mxu0 %v475
    %1398 = vmatprep.subr.mxu0 %v472
    %1399 = vmatpush1.msra.mxu0 %v471
    %1400 = vmatprep.subr.mxu0 %v468
    %1401 = vmatpush1.msra.mxu0 %v467
    %1402 = vmatprep.subr.mxu0 %v464
    %1403 = vmatpush1.msra.mxu0 %v463
    %1404 = vmatprep.subr.mxu0 %v460
    %1405 = vmatpush1.msra.mxu0 %v459
    %1406 = vmatprep.subr.mxu0 %v456
    %1407 = vmatpush1.msra.mxu0 %v455
    %1408 = vmatprep.subr.mxu0 %v452
    %1409 = vmatpush1.msra.mxu0 %v451
    %1410 = vmatprep.subr.mxu0 %v448
    %1411 = vmatpush1.msra.mxu0 %v447
    %1412 = vmatprep.subr.mxu0 %v444
    %1413 = vmatpush1.msra.mxu0 %v443
    %1414 = vmatprep.subr.mxu0 0.0
    %1415 = vmatpush2.msra.mxu0 0.0
    %1416 = vmatprep.subr.mxu0 0.0
    %1417 = vmatpush2.msra.mxu0 0.0
    %1418 = vmatprep.subr.mxu0 0.0
    %1419 = vmatpush2.msra.mxu0 0.0
    %1420 = vmatprep.subr.mxu0 0.0
    %1421 = vmatpush2.msra.mxu0 0.0
    %1422 = vmatprep.subr.mxu0 0.0
    %1423 = vmatpush2.msra.mxu0 0.0
    %1424 = vmatprep.subr.mxu0 0.0
    %1425 = vmatpush2.msra.mxu0 0.0
    %1426 = vmatprep.subr.mxu0 0.0
    %1427 = vmatpush2.msra.mxu0 0.0
    %1428 = vmatprep.subr.mxu0 0.0
    %1429 = vmatpush2.msra.mxu0 0.0
    %1430 = vmatprep.subr.mxu0 0.0
    %1431 = vmatpush2.msra.mxu0 0.0
    %1432 = vmatprep.subr.mxu0 0.0
    %1433 = vmatpush2.msra.mxu0 0.0
    %1434 = vmatprep.subr.mxu0 0.0
    %1435 = vmatpush2.msra.mxu0 0.0
    %1436 = vmatprep.subr.mxu0 0.0
    %1437 = vmatpush2.msra.mxu0 0.0
    %1438 = vmatprep.subr.mxu0 0.0
    %1439 = vmatpush2.msra.mxu0 0.0
    %1440 = vmatprep.subr.mxu0 0.0
    %1441 = vmatpush2.msra.mxu0 0.0
    %1442 = vmatprep.subr.mxu0 0.0
    %1443 = vmatpush2.msra.mxu0 0.0
    %1444 = vmatprep.subr.mxu0 0.0
    %1445 = vmatpush2.msra.mxu0 0.0
    %1446 = vmatprep.mubr.f32.mxu0 0.0
    %1447 = vmatmul.mubr.f32.gmra.mxu0 %v1376
    %v1448 = vpop.f32.mrf.mxu0
    %v1449 = vadd.f32 0.0, %v1448
    %v1450 = vpop.f32.mrf.mxu0
    %v1451 = vadd.f32 0.0, %v1450
    %1452 = vdwg.mxu0
    %1453 = vmatprep.subr.mxu0 %v506
    %1454 = vmatpush1.msra.mxu0 %v505
    %1455 = vmatprep.subr.mxu0 %v502
    %1456 = vmatpush1.msra.mxu0 %v501
    %1457 = vmatprep.subr.mxu0 %v498
    %1458 = vmatpush1.msra.mxu0 %v497
    %1459 = vmatprep.subr.mxu0 %v494
    %1460 = vmatpush1.msra.mxu0 %v493
    %1461 = vmatprep.subr.mxu0 %v490
    %1462 = vmatpush1.msra.mxu0 %v489
    %1463 = vmatprep.subr.mxu0 %v486
    %1464 = vmatpush1.msra.mxu0 %v485
    %1465 = vmatprep.subr.mxu0 %v482
    %1466 = vmatpush1.msra.mxu0 %v481
    %1467 = vmatprep.subr.mxu0 %v478
    %1468 = vmatpush1.msra.mxu0 %v477
    %1469 = vmatprep.subr.mxu0 %v474
    %1470 = vmatpush1.msra.mxu0 %v473
    %1471 = vmatprep.subr.mxu0 %v470
    %1472 = vmatpush1.msra.mxu0 %v469
    %1473 = vmatprep.subr.mxu0 %v466
    %1474 = vmatpush1.msra.mxu0 %v465
    %1475 = vmatprep.subr.mxu0 %v462
    %1476 = vmatpush1.msra.mxu0 %v461
    %1477 = vmatprep.subr.mxu0 %v458
    %1478 = vmatpush1.msra.mxu0 %v457
    %1479 = vmatprep.subr.mxu0 %v454
    %1480 = vmatpush1.msra.mxu0 %v453
    %1481 = vmatprep.subr.mxu0 %v450
    %1482 = vmatpush1.msra.mxu0 %v449
    %1483 = vmatprep.subr.mxu0 %v446
    %1484 = vmatpush1.msra.mxu0 %v445
    %1485 = vmatprep.subr.mxu0 0.0
    %1486 = vmatpush2.msra.mxu0 0.0
    %1487 = vmatprep.subr.mxu0 0.0
    %1488 = vmatpush2.msra.mxu0 0.0
    %1489 = vmatprep.subr.mxu0 0.0
    %1490 = vmatpush2.msra.mxu0 0.0
    %1491 = vmatprep.subr.mxu0 0.0
    %1492 = vmatpush2.msra.mxu0 0.0
    %1493 = vmatprep.subr.mxu0 0.0
    %1494 = vmatpush2.msra.mxu0 0.0
    %1495 = vmatprep.subr.mxu0 0.0
    %1496 = vmatpush2.msra.mxu0 0.0
    %1497 = vmatprep.subr.mxu0 0.0
    %1498 = vmatpush2.msra.mxu0 0.0
    %1499 = vmatprep.subr.mxu0 0.0
    %1500 = vmatpush2.msra.mxu0 0.0
    %1501 = vmatprep.subr.mxu0 0.0
    %1502 = vmatpush2.msra.mxu0 0.0
    %1503 = vmatprep.subr.mxu0 0.0
    %1504 = vmatpush2.msra.mxu0 0.0
    %1505 = vmatprep.subr.mxu0 0.0
    %1506 = vmatpush2.msra.mxu0 0.0
    %1507 = vmatprep.subr.mxu0 0.0
    %1508 = vmatpush2.msra.mxu0 0.0
    %1509 = vmatprep.subr.mxu0 0.0
    %1510 = vmatpush2.msra.mxu0 0.0
    %1511 = vmatprep.subr.mxu0 0.0
    %1512 = vmatpush2.msra.mxu0 0.0
    %1513 = vmatprep.subr.mxu0 0.0
    %1514 = vmatpush2.msra.mxu0 0.0
    %1515 = vmatprep.subr.mxu0 0.0
    %1516 = vmatpush2.msra.mxu0 0.0
    %1517 = vmatprep.mubr.f32.mxu0 0.0
    %1518 = vmatmul.mubr.f32.gmra.mxu0 %v1376
    %v1519 = vpop.f32.mrf.mxu0
    %v1520 = vadd.f32 0.0, %v1519
    %v1521 = vpop.f32.mrf.mxu0
    %v1522 = vadd.f32 0.0, %v1521
    %1523 = vdwg.mxu0
    %v1524 = vadd.f32 %v1378, %v1449
    %v1525 = vadd.f32 %v1379, %v1451
    %v1526 = vadd.f32 %v1380, %v1520
    %v1527 = vadd.f32 %v1381, %v1522
    %v1528 = vxor.u32 %v1524, 2147483648
    %v1529 = vmul.f32 %v1528, 1.442695
    %v1530 = vpow.pop %v1529
    %v1531 = vadd.f32 %v1530, 1.0
    %v1532 = vrcp.pop %v1531
    %v1533 = vmul.f32 1.0, %v1532
    %v1534 = vxor.u32 %v1525, 2147483648
    %v1535 = vmul.f32 %v1534, 1.442695
    %v1536 = vpow.pop %v1535
    %v1537 = vadd.f32 %v1536, 1.0
    %v1538 = vrcp.pop %v1537
    %v1539 = vmul.f32 1.0, %v1538
    %v1540 = vtanh.pop %v1526
    %v1541 = vxor.u32 %v1527, 2147483648
    %v1542 = vmul.f32 %v1541, 1.442695
    %v1543 = vpow.pop %v1542
    %v1544 = vadd.f32 %v1543, 1.0
    %v1545 = vrcp.pop %v1544
    %v1546 = vmul.f32 1.0, %v1545
    %v1547 = vmul.f32 %v1539, %v1374
    %v1548 = vmul.f32 %v1533, %v1540
    %v1549 = vadd.f32 %v1547, %v1548
    %v1550 = vtanh.pop %v1549
    %v1551 = vmul.f32 %v1546, %v1550
    %s1552 = scalar_lea.vmem [#allocation2], 192
    %v1553 = vld [vmem:[%s1552] sm:$0xff]
    %v1554 = vld [vmem:[%s1552 + $0x8] sm:$0xff]
    %v1555 = vld [vmem:[%s1552 + $0x10] sm:$0xff]
    %v1556 = vld [vmem:[%s1552 + $0x18] sm:$0xff]
    %1557 = vmatprep.subr.mxu0 %v504
    %1558 = vmatpush1.msra.mxu0 %v503
    %1559 = vmatprep.subr.mxu0 %v500
    %1560 = vmatpush1.msra.mxu0 %v499
    %1561 = vmatprep.subr.mxu0 %v496
    %1562 = vmatpush1.msra.mxu0 %v495
    %1563 = vmatprep.subr.mxu0 %v492
    %1564 = vmatpush1.msra.mxu0 %v491
    %1565 = vmatprep.subr.mxu0 %v488
    %1566 = vmatpush1.msra.mxu0 %v487
    %1567 = vmatprep.subr.mxu0 %v484
    %1568 = vmatpush1.msra.mxu0 %v483
    %1569 = vmatprep.subr.mxu0 %v480
    %1570 = vmatpush1.msra.mxu0 %v479
    %1571 = vmatprep.subr.mxu0 %v476
    %1572 = vmatpush1.msra.mxu0 %v475
    %1573 = vmatprep.subr.mxu0 %v472
    %1574 = vmatpush1.msra.mxu0 %v471
    %1575 = vmatprep.subr.mxu0 %v468
    %1576 = vmatpush1.msra.mxu0 %v467
    %1577 = vmatprep.subr.mxu0 %v464
    %1578 = vmatpush1.msra.mxu0 %v463
    %1579 = vmatprep.subr.mxu0 %v460
    %1580 = vmatpush1.msra.mxu0 %v459
    %1581 = vmatprep.subr.mxu0 %v456
    %1582 = vmatpush1.msra.mxu0 %v455
    %1583 = vmatprep.subr.mxu0 %v452
    %1584 = vmatpush1.msra.mxu0 %v451
    %1585 = vmatprep.subr.mxu0 %v448
    %1586 = vmatpush1.msra.mxu0 %v447
    %1587 = vmatprep.subr.mxu0 %v444
    %1588 = vmatpush1.msra.mxu0 %v443
    %1589 = vmatprep.subr.mxu0 0.0
    %1590 = vmatpush2.msra.mxu0 0.0
    %1591 = vmatprep.subr.mxu0 0.0
    %1592 = vmatpush2.msra.mxu0 0.0
    %1593 = vmatprep.subr.mxu0 0.0
    %1594 = vmatpush2.msra.mxu0 0.0
    %1595 = vmatprep.subr.mxu0 0.0
    %1596 = vmatpush2.msra.mxu0 0.0
    %1597 = vmatprep.subr.mxu0 0.0
    %1598 = vmatpush2.msra.mxu0 0.0
    %1599 = vmatprep.subr.mxu0 0.0
    %1600 = vmatpush2.msra.mxu0 0.0
    %1601 = vmatprep.subr.mxu0 0.0
    %1602 = vmatpush2.msra.mxu0 0.0
    %1603 = vmatprep.subr.mxu0 0.0
    %1604 = vmatpush2.msra.mxu0 0.0
    %1605 = vmatprep.subr.mxu0 0.0
    %1606 = vmatpush2.msra.mxu0 0.0
    %1607 = vmatprep.subr.mxu0 0.0
    %1608 = vmatpush2.msra.mxu0 0.0
    %1609 = vmatprep.subr.mxu0 0.0
    %1610 = vmatpush2.msra.mxu0 0.0
    %1611 = vmatprep.subr.mxu0 0.0
    %1612 = vmatpush2.msra.mxu0 0.0
    %1613 = vmatprep.subr.mxu0 0.0
    %1614 = vmatpush2.msra.mxu0 0.0
    %1615 = vmatprep.subr.mxu0 0.0
    %1616 = vmatpush2.msra.mxu0 0.0
    %1617 = vmatprep.subr.mxu0 0.0
    %1618 = vmatpush2.msra.mxu0 0.0
    %1619 = vmatprep.subr.mxu0 0.0
    %1620 = vmatpush2.msra.mxu0 0.0
    %1621 = vmatprep.mubr.f32.mxu0 0.0
    %1622 = vmatmul.mubr.f32.gmra.mxu0 %v1551
    %v1623 = vpop.f32.mrf.mxu0
    %v1624 = vadd.f32 0.0, %v1623
    %v1625 = vpop.f32.mrf.mxu0
    %v1626 = vadd.f32 0.0, %v1625
    %1627 = vdwg.mxu0
    %1628 = vmatprep.subr.mxu0 %v506
    %1629 = vmatpush1.msra.mxu0 %v505
    %1630 = vmatprep.subr.mxu0 %v502
    %1631 = vmatpush1.msra.mxu0 %v501
    %1632 = vmatprep.subr.mxu0 %v498
    %1633 = vmatpush1.msra.mxu0 %v497
    %1634 = vmatprep.subr.mxu0 %v494
    %1635 = vmatpush1.msra.mxu0 %v493
    %1636 = vmatprep.subr.mxu0 %v490
    %1637 = vmatpush1.msra.mxu0 %v489
    %1638 = vmatprep.subr.mxu0 %v486
    %1639 = vmatpush1.msra.mxu0 %v485
    %1640 = vmatprep.subr.mxu0 %v482
    %1641 = vmatpush1.msra.mxu0 %v481
    %1642 = vmatprep.subr.mxu0 %v478
    %1643 = vmatpush1.msra.mxu0 %v477
    %1644 = vmatprep.subr.mxu0 %v474
    %1645 = vmatpush1.msra.mxu0 %v473
    %1646 = vmatprep.subr.mxu0 %v470
    %1647 = vmatpush1.msra.mxu0 %v469
    %1648 = vmatprep.subr.mxu0 %v466
    %1649 = vmatpush1.msra.mxu0 %v465
    %1650 = vmatprep.subr.mxu0 %v462
    %1651 = vmatpush1.msra.mxu0 %v461
    %1652 = vmatprep.subr.mxu0 %v458
    %1653 = vmatpush1.msra.mxu0 %v457
    %1654 = vmatprep.subr.mxu0 %v454
    %1655 = vmatpush1.msra.mxu0 %v453
    %1656 = vmatprep.subr.mxu0 %v450
    %1657 = vmatpush1.msra.mxu0 %v449
    %1658 = vmatprep.subr.mxu0 %v446
    %1659 = vmatpush1.msra.mxu0 %v445
    %1660 = vmatprep.subr.mxu0 0.0
    %1661 = vmatpush2.msra.mxu0 0.0
    %1662 = vmatprep.subr.mxu0 0.0
    %1663 = vmatpush2.msra.mxu0 0.0
    %1664 = vmatprep.subr.mxu0 0.0
    %1665 = vmatpush2.msra.mxu0 0.0
    %1666 = vmatprep.subr.mxu0 0.0
    %1667 = vmatpush2.msra.mxu0 0.0
    %1668 = vmatprep.subr.mxu0 0.0
    %1669 = vmatpush2.msra.mxu0 0.0
    %1670 = vmatprep.subr.mxu0 0.0
    %1671 = vmatpush2.msra.mxu0 0.0
    %1672 = vmatprep.subr.mxu0 0.0
    %1673 = vmatpush2.msra.mxu0 0.0
    %1674 = vmatprep.subr.mxu0 0.0
    %1675 = vmatpush2.msra.mxu0 0.0
    %1676 = vmatprep.subr.mxu0 0.0
    %1677 = vmatpush2.msra.mxu0 0.0
    %1678 = vmatprep.subr.mxu0 0.0
    %1679 = vmatpush2.msra.mxu0 0.0
    %1680 = vmatprep.subr.mxu0 0.0
    %1681 = vmatpush2.msra.mxu0 0.0
    %1682 = vmatprep.subr.mxu0 0.0
    %1683 = vmatpush2.msra.mxu0 0.0
    %1684 = vmatprep.subr.mxu0 0.0
    %1685 = vmatpush2.msra.mxu0 0.0
    %1686 = vmatprep.subr.mxu0 0.0
    %1687 = vmatpush2.msra.mxu0 0.0
    %1688 = vmatprep.subr.mxu0 0.0
    %1689 = vmatpush2.msra.mxu0 0.0
    %1690 = vmatprep.subr.mxu0 0.0
    %1691 = vmatpush2.msra.mxu0 0.0
    %1692 = vmatprep.mubr.f32.mxu0 0.0
    %1693 = vmatmul.mubr.f32.gmra.mxu0 %v1551
    %v1694 = vpop.f32.mrf.mxu0
    %v1695 = vadd.f32 0.0, %v1694
    %v1696 = vpop.f32.mrf.mxu0
    %v1697 = vadd.f32 0.0, %v1696
    %1698 = vdwg.mxu0
    %v1699 = vadd.f32 %v1553, %v1624
    %v1700 = vadd.f32 %v1554, %v1626
    %v1701 = vadd.f32 %v1555, %v1695
    %v1702 = vadd.f32 %v1556, %v1697
    %v1703 = vxor.u32 %v1699, 2147483648
    %v1704 = vmul.f32 %v1703, 1.442695
    %v1705 = vpow.pop %v1704
    %v1706 = vadd.f32 %v1705, 1.0
    %v1707 = vrcp.pop %v1706
    %v1708 = vmul.f32 1.0, %v1707
    %v1709 = vxor.u32 %v1700, 2147483648
    %v1710 = vmul.f32 %v1709, 1.442695
    %v1711 = vpow.pop %v1710
    %v1712 = vadd.f32 %v1711, 1.0
    %v1713 = vrcp.pop %v1712
    %v1714 = vmul.f32 1.0, %v1713
    %v1715 = vtanh.pop %v1701
    %v1716 = vxor.u32 %v1702, 2147483648
    %v1717 = vmul.f32 %v1716, 1.442695
    %v1718 = vpow.pop %v1717
    %v1719 = vadd.f32 %v1718, 1.0
    %v1720 = vrcp.pop %v1719
    %v1721 = vmul.f32 1.0, %v1720
    %v1722 = vmul.f32 %v1714, %v1549
    %v1723 = vmul.f32 %v1708, %v1715
    %v1724 = vadd.f32 %v1722, %v1723
    %v1725 = vtanh.pop %v1724
    %v1726 = vmul.f32 %v1721, %v1725
    %s1727 = scalar_lea.vmem [#allocation2], 224
    %v1728 = vld [vmem:[%s1727] sm:$0xff]
    %v1729 = vld [vmem:[%s1727 + $0x8] sm:$0xff]
    %v1730 = vld [vmem:[%s1727 + $0x10] sm:$0xff]
    %v1731 = vld [vmem:[%s1727 + $0x18] sm:$0xff]
    %1732 = vmatprep.subr.mxu0 %v504
    %1733 = vmatpush1.msra.mxu0 %v503
    %1734 = vmatprep.subr.mxu0 %v500
    %1735 = vmatpush1.msra.mxu0 %v499
    %1736 = vmatprep.subr.mxu0 %v496
    %1737 = vmatpush1.msra.mxu0 %v495
    %1738 = vmatprep.subr.mxu0 %v492
    %1739 = vmatpush1.msra.mxu0 %v491
    %1740 = vmatprep.subr.mxu0 %v488
    %1741 = vmatpush1.msra.mxu0 %v487
    %1742 = vmatprep.subr.mxu0 %v484
    %1743 = vmatpush1.msra.mxu0 %v483
    %1744 = vmatprep.subr.mxu0 %v480
    %1745 = vmatpush1.msra.mxu0 %v479
    %1746 = vmatprep.subr.mxu0 %v476
    %1747 = vmatpush1.msra.mxu0 %v475
    %1748 = vmatprep.subr.mxu0 %v472
    %1749 = vmatpush1.msra.mxu0 %v471
    %1750 = vmatprep.subr.mxu0 %v468
    %1751 = vmatpush1.msra.mxu0 %v467
    %1752 = vmatprep.subr.mxu0 %v464
    %1753 = vmatpush1.msra.mxu0 %v463
    %1754 = vmatprep.subr.mxu0 %v460
    %1755 = vmatpush1.msra.mxu0 %v459
    %1756 = vmatprep.subr.mxu0 %v456
    %1757 = vmatpush1.msra.mxu0 %v455
    %1758 = vmatprep.subr.mxu0 %v452
    %1759 = vmatpush1.msra.mxu0 %v451
    %1760 = vmatprep.subr.mxu0 %v448
    %1761 = vmatpush1.msra.mxu0 %v447
    %1762 = vmatprep.subr.mxu0 %v444
    %1763 = vmatpush1.msra.mxu0 %v443
    %1764 = vmatprep.subr.mxu0 0.0
    %1765 = vmatpush2.msra.mxu0 0.0
    %1766 = vmatprep.subr.mxu0 0.0
    %1767 = vmatpush2.msra.mxu0 0.0
    %1768 = vmatprep.subr.mxu0 0.0
    %1769 = vmatpush2.msra.mxu0 0.0
    %1770 = vmatprep.subr.mxu0 0.0
    %1771 = vmatpush2.msra.mxu0 0.0
    %1772 = vmatprep.subr.mxu0 0.0
    %1773 = vmatpush2.msra.mxu0 0.0
    %1774 = vmatprep.subr.mxu0 0.0
    %1775 = vmatpush2.msra.mxu0 0.0
    %1776 = vmatprep.subr.mxu0 0.0
    %1777 = vmatpush2.msra.mxu0 0.0
    %1778 = vmatprep.subr.mxu0 0.0
    %1779 = vmatpush2.msra.mxu0 0.0
    %1780 = vmatprep.subr.mxu0 0.0
    %1781 = vmatpush2.msra.mxu0 0.0
    %1782 = vmatprep.subr.mxu0 0.0
    %1783 = vmatpush2.msra.mxu0 0.0
    %1784 = vmatprep.subr.mxu0 0.0
    %1785 = vmatpush2.msra.mxu0 0.0
    %1786 = vmatprep.subr.mxu0 0.0
    %1787 = vmatpush2.msra.mxu0 0.0
    %1788 = vmatprep.subr.mxu0 0.0
    %1789 = vmatpush2.msra.mxu0 0.0
    %1790 = vmatprep.subr.mxu0 0.0
    %1791 = vmatpush2.msra.mxu0 0.0
    %1792 = vmatprep.subr.mxu0 0.0
    %1793 = vmatpush2.msra.mxu0 0.0
    %1794 = vmatprep.subr.mxu0 0.0
    %1795 = vmatpush2.msra.mxu0 0.0
    %1796 = vmatprep.mubr.f32.mxu0 0.0
    %1797 = vmatmul.mubr.f32.gmra.mxu0 %v1726
    %v1798 = vpop.f32.mrf.mxu0
    %v1799 = vadd.f32 0.0, %v1798
    %v1800 = vpop.f32.mrf.mxu0
    %v1801 = vadd.f32 0.0, %v1800
    %1802 = vdwg.mxu0
    %1803 = vmatprep.subr.mxu0 %v506
    %1804 = vmatpush1.msra.mxu0 %v505
    %1805 = vmatprep.subr.mxu0 %v502
    %1806 = vmatpush1.msra.mxu0 %v501
    %1807 = vmatprep.subr.mxu0 %v498
    %1808 = vmatpush1.msra.mxu0 %v497
    %1809 = vmatprep.subr.mxu0 %v494
    %1810 = vmatpush1.msra.mxu0 %v493
    %1811 = vmatprep.subr.mxu0 %v490
    %1812 = vmatpush1.msra.mxu0 %v489
    %1813 = vmatprep.subr.mxu0 %v486
    %1814 = vmatpush1.msra.mxu0 %v485
    %1815 = vmatprep.subr.mxu0 %v482
    %1816 = vmatpush1.msra.mxu0 %v481
    %1817 = vmatprep.subr.mxu0 %v478
    %1818 = vmatpush1.msra.mxu0 %v477
    %1819 = vmatprep.subr.mxu0 %v474
    %1820 = vmatpush1.msra.mxu0 %v473
    %1821 = vmatprep.subr.mxu0 %v470
    %1822 = vmatpush1.msra.mxu0 %v469
    %1823 = vmatprep.subr.mxu0 %v466
    %1824 = vmatpush1.msra.mxu0 %v465
    %1825 = vmatprep.subr.mxu0 %v462
    %1826 = vmatpush1.msra.mxu0 %v461
    %1827 = vmatprep.subr.mxu0 %v458
    %1828 = vmatpush1.msra.mxu0 %v457
    %1829 = vmatprep.subr.mxu0 %v454
    %1830 = vmatpush1.msra.mxu0 %v453
    %1831 = vmatprep.subr.mxu0 %v450
    %1832 = vmatpush1.msra.mxu0 %v449
    %1833 = vmatprep.subr.mxu0 %v446
    %1834 = vmatpush1.msra.mxu0 %v445
    %1835 = vmatprep.subr.mxu0 0.0
    %1836 = vmatpush2.msra.mxu0 0.0
    %1837 = vmatprep.subr.mxu0 0.0
    %1838 = vmatpush2.msra.mxu0 0.0
    %1839 = vmatprep.subr.mxu0 0.0
    %1840 = vmatpush2.msra.mxu0 0.0
    %1841 = vmatprep.subr.mxu0 0.0
    %1842 = vmatpush2.msra.mxu0 0.0
    %1843 = vmatprep.subr.mxu0 0.0
    %1844 = vmatpush2.msra.mxu0 0.0
    %1845 = vmatprep.subr.mxu0 0.0
    %1846 = vmatpush2.msra.mxu0 0.0
    %1847 = vmatprep.subr.mxu0 0.0
    %1848 = vmatpush2.msra.mxu0 0.0
    %1849 = vmatprep.subr.mxu0 0.0
    %1850 = vmatpush2.msra.mxu0 0.0
    %1851 = vmatprep.subr.mxu0 0.0
    %1852 = vmatpush2.msra.mxu0 0.0
    %1853 = vmatprep.subr.mxu0 0.0
    %1854 = vmatpush2.msra.mxu0 0.0
    %1855 = vmatprep.subr.mxu0 0.0
    %1856 = vmatpush2.msra.mxu0 0.0
    %1857 = vmatprep.subr.mxu0 0.0
    %1858 = vmatpush2.msra.mxu0 0.0
    %1859 = vmatprep.subr.mxu0 0.0
    %1860 = vmatpush2.msra.mxu0 0.0
    %1861 = vmatprep.subr.mxu0 0.0
    %1862 = vmatpush2.msra.mxu0 0.0
    %1863 = vmatprep.subr.mxu0 0.0
    %1864 = vmatpush2.msra.mxu0 0.0
    %1865 = vmatprep.subr.mxu0 0.0
    %1866 = vmatpush2.msra.mxu0 0.0
    %1867 = vmatprep.mubr.f32.mxu0 0.0
    %1868 = vmatmul.mubr.f32.gmra.mxu0 %v1726
    %v1869 = vpop.f32.mrf.mxu0
    %v1870 = vadd.f32 0.0, %v1869
    %v1871 = vpop.f32.mrf.mxu0
    %v1872 = vadd.f32 0.0, %v1871
    %1873 = vdwg.mxu0
    %v1874 = vadd.f32 %v1728, %v1799
    %v1875 = vadd.f32 %v1729, %v1801
    %v1876 = vadd.f32 %v1730, %v1870
    %v1877 = vadd.f32 %v1731, %v1872
    %v1878 = vxor.u32 %v1874, 2147483648
    %v1879 = vmul.f32 %v1878, 1.442695
    %v1880 = vpow.pop %v1879
    %v1881 = vadd.f32 %v1880, 1.0
    %v1882 = vrcp.pop %v1881
    %v1883 = vmul.f32 1.0, %v1882
    %v1884 = vxor.u32 %v1875, 2147483648
    %v1885 = vmul.f32 %v1884, 1.442695
    %v1886 = vpow.pop %v1885
    %v1887 = vadd.f32 %v1886, 1.0
    %v1888 = vrcp.pop %v1887
    %v1889 = vmul.f32 1.0, %v1888
    %v1890 = vtanh.pop %v1876
    %v1891 = vxor.u32 %v1877, 2147483648
    %v1892 = vmul.f32 %v1891, 1.442695
    %v1893 = vpow.pop %v1892
    %v1894 = vadd.f32 %v1893, 1.0
    %v1895 = vrcp.pop %v1894
    %v1896 = vmul.f32 1.0, %v1895
    %v1897 = vmul.f32 %v1889, %v1724
    %v1898 = vmul.f32 %v1883, %v1890
    %v1899 = vadd.f32 %v1897, %v1898
    %v1900 = vtanh.pop %v1899
    %v1901 = vmul.f32 %v1896, %v1900
    %1902 = vst [vmem:[#allocation3] sm:$0xff] %v1901
    %1903 = vst [vmem:[#allocation4] sm:$0xff] %v1899
    // Predicated region
    $region46: #{tpu_custom_call.1} parent=1 // pred_check
      %p1904 = pneg %p79
    $region47: #{tpu_custom_call.1} parent=1 // pred_check_branch
      %1906 = sbr.rel (%p1904) target = $region49
    $region48: #{tpu_custom_call.1} parent=1 // pred_region
      %v1907 = vld [vmem:[#allocation11] sm:$0xff]
      %v1908 = vld [vmem:[#allocation11 + $0x8] sm:$0xff]
      %v1909 = vld [vmem:[#allocation11 + $0x10] sm:$0xff]
      %v1910 = vld [vmem:[#allocation11 + $0x18] sm:$0xff]
      %v1911 = vld [vmem:[#allocation11 + $0x20] sm:$0xff]
      %v1912 = vld [vmem:[#allocation11 + $0x28] sm:$0xff]
      %v1913 = vld [vmem:[#allocation11 + $0x30] sm:$0xff]
      %v1914 = vld [vmem:[#allocation11 + $0x38] sm:$0xff]
      %v1915 = vld [vmem:[#allocation11 + $0x40] sm:$0xff]
      %v1916 = vld [vmem:[#allocation11 + $0x48] sm:$0xff]
      %v1917 = vld [vmem:[#allocation11 + $0x50] sm:$0xff]
      %v1918 = vld [vmem:[#allocation11 + $0x58] sm:$0xff]
      %v1919 = vld [vmem:[#allocation11 + $0x60] sm:$0xff]
      %v1920 = vld [vmem:[#allocation11 + $0x68] sm:$0xff]
      %v1921 = vld [vmem:[#allocation11 + $0x70] sm:$0xff]
      %v1922 = vld [vmem:[#allocation11 + $0x78] sm:$0xff]
      %v1923 = vld [vmem:[%s5] sm:$0x1]
      %v1925 = vlaneseq
      %v1926 = vshrl.u32 %v1925, 7
      %v1927 = vsub.s32 0, %v1926
      %v1928 = vrot.slane %v1923, %v1927
      %1930 = vmatprep.subr.mxu0 0.0
      %1931 = vmatpush1.msra.mxu0 %v1922
      %1932 = vmatprep.subr.mxu0 0.0
      %1933 = vmatpush1.msra.mxu0 %v1921
      %1934 = vmatprep.subr.mxu0 0.0
      %1935 = vmatpush1.msra.mxu0 %v1920
      %1936 = vmatprep.subr.mxu0 0.0
      %1937 = vmatpush1.msra.mxu0 %v1919
      %1938 = vmatprep.subr.mxu0 0.0
      %1939 = vmatpush1.msra.mxu0 %v1918
      %1940 = vmatprep.subr.mxu0 0.0
      %1941 = vmatpush1.msra.mxu0 %v1917
      %1942 = vmatprep.subr.mxu0 0.0
      %1943 = vmatpush1.msra.mxu0 %v1916
      %1944 = vmatprep.subr.mxu0 0.0
      %1945 = vmatpush1.msra.mxu0 %v1915
      %1946 = vmatprep.subr.mxu0 0.0
      %1947 = vmatpush1.msra.mxu0 %v1914
      %1948 = vmatprep.subr.mxu0 0.0
      %1949 = vmatpush1.msra.mxu0 %v1913
      %1950 = vmatprep.subr.mxu0 0.0
      %1951 = vmatpush1.msra.mxu0 %v1912
      %1952 = vmatprep.subr.mxu0 0.0
      %1953 = vmatpush1.msra.mxu0 %v1911
      %1954 = vmatprep.subr.mxu0 0.0
      %1955 = vmatpush1.msra.mxu0 %v1910
      %1956 = vmatprep.subr.mxu0 0.0
      %1957 = vmatpush1.msra.mxu0 %v1909
      %1958 = vmatprep.subr.mxu0 0.0
      %1959 = vmatpush1.msra.mxu0 %v1908
      %1960 = vmatprep.subr.mxu0 0.0
      %1961 = vmatpush1.msra.mxu0 %v1907
      %1962 = vmatprep.subr.mxu0 0.0
      %1963 = vmatpush2.msra.mxu0 0.0
      %1964 = vmatprep.subr.mxu0 0.0
      %1965 = vmatpush2.msra.mxu0 0.0
      %1966 = vmatprep.subr.mxu0 0.0
      %1967 = vmatpush2.msra.mxu0 0.0
      %1968 = vmatprep.subr.mxu0 0.0
      %1969 = vmatpush2.msra.mxu0 0.0
      %1970 = vmatprep.subr.mxu0 0.0
      %1971 = vmatpush2.msra.mxu0 0.0
      %1972 = vmatprep.subr.mxu0 0.0
      %1973 = vmatpush2.msra.mxu0 0.0
      %1974 = vmatprep.subr.mxu0 0.0
      %1975 = vmatpush2.msra.mxu0 0.0
      %1976 = vmatprep.subr.mxu0 0.0
      %1977 = vmatpush2.msra.mxu0 0.0
      %1978 = vmatprep.subr.mxu0 0.0
      %1979 = vmatpush2.msra.mxu0 0.0
      %1980 = vmatprep.subr.mxu0 0.0
      %1981 = vmatpush2.msra.mxu0 0.0
      %1982 = vmatprep.subr.mxu0 0.0
      %1983 = vmatpush2.msra.mxu0 0.0
      %1984 = vmatprep.subr.mxu0 0.0
      %1985 = vmatpush2.msra.mxu0 0.0
      %1986 = vmatprep.subr.mxu0 0.0
      %1987 = vmatpush2.msra.mxu0 0.0
      %1988 = vmatprep.subr.mxu0 0.0
      %1989 = vmatpush2.msra.mxu0 0.0
      %1990 = vmatprep.subr.mxu0 0.0
      %1991 = vmatpush2.msra.mxu0 0.0
      %1992 = vmatprep.subr.mxu0 0.0
      %1993 = vmatpush2.msra.mxu0 0.0
      %1994 = vmatprep.mubr.f32.mxu0 0.0
      %1995 = vmatmul.mubr.f32.gmra.mxu0 %v1901
      %v1996 = vpop.f32.mrf.mxu0
      %v1997 = vadd.f32 %v1928, %v1996
      %v1998 = vpop.f32.mrf.mxu0
      %1999 = vdwg.mxu0
      %2000 = vst [vmem:[#allocation13] sm:$0xff] %v1997
    $region49: #{tpu_custom_call.1} parent=1 // pred_fallthru
      _
    // Predicated region
    $region50: #{tpu_custom_call.1} parent=1 // pred_check
      _
    $region51: #{tpu_custom_call.1} parent=1 // pred_check_branch
      %2002 = sbr.rel (0) target = $region53
    $region52: #{tpu_custom_call.1} parent=1 // pred_region
      %s2004 = ssub.s32 128, 128
      %2005 = vsyncadd [#allocation7], %s2004
      %s2007 = sshll.u32 [#allocation13], 4
      %s2008 = int_to_ptr.vmem [resolvable:$true] %s2007
      %2010 = dma.vmem_to_hbm [thread:$0]  %s2008, 128, %s6, [#allocation7]
    $region53: #{tpu_custom_call.1} parent=1 // pred_fallthru
      _
    // Predicated region
    $region54: #{tpu_custom_call.1} parent=1 // pred_check
      _
    $region55: #{tpu_custom_call.1} parent=1 // pred_check_branch
      %2012 = sbr.rel (0) target = $region57
    $region56: #{tpu_custom_call.1} parent=1 // pred_region
      %2013 = dma.done [#allocation7], 128
    $region57: #{tpu_custom_call.1} parent=1 // pred_fallthru
      _
    %2014 = vsyncpa [#allocation6], 1
    %2015 = vsyncpa [#allocation9], 1
    %2016 = vsyncpa [#allocation12], 1
    %2017 = vsyncpa [#allocation7], 1

</llo_original>
